<compile_context>
chip_gen: v5e
topology: v5e:2x2
jax: 0.10.0
libtpu: 0.0.40
codegen_flags: <defaults>
</compile_context>

<pallas_src>
import functools
import math

import jax
import jax.numpy as jnp
from jax import lax
from jax.experimental import pallas as pl
from jax.experimental.pallas import tpu as pltpu


def _round_up(a, m):
    return ((a + m - 1) // m) * m


def _num_tensorcores():
    """Best-effort count of TensorCores that share one pallas_call's grid."""
    try:
        info = pltpu.get_tpu_info()
        for attr in ("num_tensorcores", "tensorcores_per_chip", "num_cores_per_chip"):
            v = getattr(info, attr, None)
            if v:
                return int(v)
    except Exception:
        pass
    try:
        kind = jax.devices()[0].device_kind.lower()
        if "v7" in kind or "7x" in kind:
            return 2
    except Exception:
        pass
    return 1


def _hist_kernel(x_ref, c_ref, o_ref, acc_ref, *,
                 neg_scale, out_scale, use_exp2,
                 n_valid, n_k, subrows, sub, group, unroll):
    """Accumulate Gaussian responses of one (subrows, sub) sample block.

    x_ref:   (subrows, sub)  raw samples, lane-dense
    c_ref:   (BC, 1)         raw centers for this bin chunk
    o_ref:   (BC, 1)         partial histogram for this (p, bin-chunk)
    acc_ref: (BC, sub)       f32 VMEM accumulator (persists across the k axis)
    """
    p = pl.program_id(0)
    k = pl.program_id(2)

    @pl.when(k == 0)
    def _():
        acc_ref[...] = jnp.zeros_like(acc_ref)

    bc_dim = c_ref.shape[0]
    # Hoist the (BC, 1) -> (BC, sub) broadcast of the centers out of all loops.
    cs = jnp.broadcast_to(c_ref[...], (bc_dim, sub))

    exp_fn = jnp.exp2 if use_exp2 else jnp.exp
    block_elems = subrows * sub
    block_start = (p * n_k + k) * block_elems
    n_groups = subrows // group

    def row_term(row):
        d = x_ref[pl.ds(row, 1), :] - cs           # (BC, sub)
        return exp_fn(d * d * neg_scale)           # scale folded into constant

    # ---- fast path: every sample in this block is valid --------------------
    @pl.when(block_start + block_elems <= n_valid)
    def _():
        def body(g, carry):
            base = pl.multiple_of(g * group, group)
            part = row_term(base)
            for t in range(1, group):
                part = part + row_term(base + t)
            acc_ref[...] += part                   # one RMW per `group` rows
            return carry
        lax.fori_loop(0, n_groups, body, 0, unroll=unroll)

    # ---- tail path: the block straddles n_valid -> mask by sample index ----
    @pl.when(jnp.logical_and(block_start < n_valid,
                             block_start + block_elems > n_valid))
    def _():
        lane = lax.broadcasted_iota(jnp.int32, (1, sub), 1)

        def body(g, carry):
            base = pl.multiple_of(g * group, group)
            part = None
            for t in range(group):
                row = base + t
                e = row_term(row)
                rem = n_valid - (block_start + row * sub)
                e = jnp.where(lane < rem, e, 0.0)
                part = e if part is None else part + e
            acc_ref[...] += part
            return carry
        lax.fori_loop(0, n_groups, body, 0, unroll=unroll)

    # Blocks entirely past n_valid: no compute at all (acc already holds the sum).

    @pl.when(k == pl.num_programs(2) - 1)
    def _():
        # Single cross-lane (XLU) reduce + constant scale, once per (p, bin-chunk).
        o_ref[...] = (jnp.sum(acc_ref[...], axis=1, keepdims=True)
                      * out_scale).astype(o_ref.dtype)


class GaussianHistogram:
    """JAX/Pallas port of the PyTorch GaussianHistogram module (forward only)."""

    def __init__(self, bins, min, max, sigma):
        self.bins = int(bins)
        self.min = float(min)
        self.max = float(max)
        self.sigma = float(sigma)
        self.delta = float(max - min) / float(bins)
        # Deterministic "parameter" init, exactly as in the PyTorch __init__.
        self.centers = (self.min
                        + self.delta * (jnp.arange(self.bins, dtype=jnp.float32) + 0.5))

    def __call__(self, x):
        return self.forward(x)

    def forward(self, x):
        x = jnp.asarray(x, dtype=jnp.float32).reshape(-1)
        n = int(x.shape[0])
        bins = self.bins

        # --- bin-chunk sizing (guard for large bins: tile in <=128-bin chunks) ---
        bc = _round_up(bins, 8) if bins <= 128 else 128
        bins_p = _round_up(bins, bc)
        n_bc = bins_p // bc

        # --- lane width: keep the (bc, sub) work tile <= 16 vregs ----------------
        sub = 128
        while sub < 512 and bc * (sub * 2) <= 16 * 1024:
            sub *= 2

        group = 4                                   # sample rows per acc update
        n_rows = max(1, -(-n // sub))               # cdiv(n, sub)
        row_cap = max(128, (1 << 16) // sub)        # ~64K samples per grid step
        subrows = min(_round_up(n_rows, group), row_cap)
        blocks = -(-n_rows // subrows)

        multi_tc = _num_tensorcores() >= 2
        p_dim = 2 if (multi_tc and blocks >= 2) else 1
        n_k = -(-blocks // p_dim)
        n_pad = p_dim * n_k * subrows * sub

        if n_pad > n:
            # TODO(synk): this concatenate copies x once in HBM; a manual-DMA
            # (memory_space=pl.ANY) path could stream the unpadded x directly.
            x = jnp.concatenate([x, jnp.zeros((n_pad - n,), jnp.float32)])
        x4 = x.reshape(p_dim, n_k, subrows, sub)

        # Raw (unscaled) centers in column layout; padded rows are 0 and get
        # sliced off after the call.
        c = jnp.zeros((bins_p, 1), jnp.float32).at[:bins, 0].set(self.centers)

        out_scale = self.delta / (self.sigma * math.sqrt(2.0 * math.pi))
        n_groups = subrows // group
        unroll = True if n_groups <= 2 else 2       # ~8-row scheduled window

        def run(use_exp2, semantics):
            if use_exp2:
                neg_scale = -math.log2(math.e) / (2.0 * self.sigma ** 2)
            else:
                neg_scale = -1.0 / (2.0 * self.sigma ** 2)
            kernel = functools.partial(
                _hist_kernel, neg_scale=neg_scale, out_scale=out_scale,
                use_exp2=use_exp2, n_valid=n, n_k=n_k,
                subrows=subrows, sub=sub, group=group, unroll=unroll)
            return pl.pallas_call(
                kernel,
                out_shape=jax.ShapeDtypeStruct((p_dim, bins_p, 1), jnp.float32),
                grid_spec=pltpu.PrefetchScalarGridSpec(
                    num_scalar_prefetch=0,
                    grid=(p_dim, n_bc, n_k),
                    in_specs=[
                        # (subrows, sub) sample tile per grid step.
                        pl.BlockSpec((None, None, subrows, sub),
                                     lambda p, b, k: (p, k, 0, 0)),
                        # Centers chunk: resident across the k axis.
                        pl.BlockSpec((bc, 1), lambda p, b, k: (b, 0)),
                    ],
                    out_specs=pl.BlockSpec((None, bc, 1),
                                           lambda p, b, k: (p, b, 0)),
                    scratch_shapes=[pltpu.VMEM((bc, sub), jnp.float32)],
                ),
                compiler_params=pltpu.CompilerParams(
                    dimension_semantics=semantics),
            )(x4, c)

        # Config ladder: prefer exp2 + core-parallel sharding of the p axis
        # (multi-TC chips), fall back to documented-safe configs on failure.
        configs = []
        core_par = getattr(pltpu, "CORE_PARALLEL", None)
        arb = getattr(pltpu, "ARBITRARY", "arbitrary")
        if p_dim == 2 and core_par is not None:
            configs.append((True, (core_par, arb, arb)))
        configs.append((True, ("parallel", "arbitrary", "arbitrary")))
        configs.append((False, ("parallel", "arbitrary", "arbitrary")))

        out = None
        last_err = None
        for use_exp2, sems in configs:
            try:
                out = run(use_exp2, sems)
                break
            except Exception as e:                  # compile / lowering fallback
                last_err = e
        if out is None:
            raise last_err

        # Sum the P partial histograms (tiny XLA add) and drop padded bins.
        return out.sum(axis=0)[:bins, 0]


def _reference(x, centers, sigma, delta):
    d = x[None, :] - centers[:, None]
    g = jnp.exp(-0.5 * (d / sigma) ** 2) / (sigma * math.sqrt(2.0 * math.pi)) * delta
    return g.sum(axis=1)


if __name__ == "__main__":
    key = jax.random.PRNGKey(0)
    n = 1024
    x = jax.random.normal(key, (n,), dtype=jnp.float32)

    hist = GaussianHistogram(bins=64, min=-3.0, max=3.0, sigma=0.1)

    out = jax.block_until_ready(hist(x))
    ref = _reference(x, hist.centers, hist.sigma, hist.delta)
    assert out.shape == (64,), out.shape
    assert bool(jnp.all(jnp.isfinite(out)))
    assert jnp.allclose(out, ref, atol=1e-3, rtol=1e-3), float(jnp.max(jnp.abs(out - ref)))

    # Ragged N that is not a multiple of the tile (exercises the in-kernel mask).
    x2 = jax.random.normal(jax.random.PRNGKey(1), (1000,), dtype=jnp.float32)
    out2 = jax.block_until_ready(hist(x2))
    ref2 = _reference(x2, hist.centers, hist.sigma, hist.delta)
    assert jnp.allclose(out2, ref2, atol=1e-3, rtol=1e-3), float(jnp.max(jnp.abs(out2 - ref2)))

    print("KERNEL_OK")
</pallas_src>

<mosaic_0001>
module attributes {stable_mosaic.version = 11 : i64} {
  func.func @_hist_kernel(%arg0: i32, %arg1: i32, %arg2: i32, %arg3: memref<1x1x4x256xf32, #tpu.memory_space<vmem>>, %arg4: memref<64x1xf32, #tpu.memory_space<vmem>>, %arg5: memref<1x64x1xf32, #tpu.memory_space<vmem>>, %arg6: memref<64x256xf32, #tpu.memory_space<vmem>>) attributes {dimension_semantics = [#tpu.dimension_semantics<parallel>, #tpu.dimension_semantics<arbitrary>, #tpu.dimension_semantics<arbitrary>], iteration_bounds = array<i64: 1, 1, 1>, scalar_prefetch = 0 : i64, scratch_operands = 1 : i64, tpu.core_type = #tpu.core_type<tc>, window_params = [{transform_indices = @transform_0, window_bounds = array<i64: 1, 1, 4, 256>}, {transform_indices = @transform_1, window_bounds = array<i64: 64, 1>}, {transform_indices = @transform_2, window_bounds = array<i64: 1, 64, 1>}]} {
    %c0_i32 = arith.constant 0 : i32
    %0 = arith.cmpi eq, %arg2, %c0_i32 : i32
    %1 = arith.extui %0 : i1 to i32
    %c0_i32_0 = arith.constant 0 : i32
    %2 = arith.cmpi ne, %1, %c0_i32_0 : i32
    scf.if %2 {
      %cst = arith.constant 0.000000e+00 : f32
      %22 = vector.broadcast %cst : f32 to vector<64x256xf32>
      %c0_11 = arith.constant 0 : index
      %c0_12 = arith.constant 0 : index
      %23 = vector.load %arg6[%c0_11, %c0_12] : memref<64x256xf32, #tpu.memory_space<vmem>>, vector<64x256xf32>
      tpu.vector_store %arg6[%c0_11, %c0_12], %22 {strides = array<i32>} : memref<64x256xf32, #tpu.memory_space<vmem>>, vector<64x256xf32>,
    } else {
    }
    %c0 = arith.constant 0 : index
    %c0_1 = arith.constant 0 : index
    %3 = vector.load %arg4[%c0, %c0_1] : memref<64x1xf32, #tpu.memory_space<vmem>>, vector<64x1xf32>
    %4 = vector.shape_cast %3 : vector<64x1xf32> to vector<64x1xf32>
    %5 = vector.broadcast %4 : vector<64x1xf32> to vector<64x256xf32>
    %c1_i32 = arith.constant 1 : i32
    %6 = arith.muli %arg0, %c1_i32 : i32
    %7 = arith.addi %6, %arg2 : i32
    %c1024_i32 = arith.constant 1024 : i32
    %8 = arith.muli %7, %c1024_i32 : i32
    %c1024_i32_2 = arith.constant 1024 : i32
    %9 = arith.addi %8, %c1024_i32_2 : i32
    %c1024_i32_3 = arith.constant 1024 : i32
    %10 = arith.cmpi sle, %9, %c1024_i32_3 : i32
    %11 = arith.extui %10 : i1 to i32
    %c0_i32_4 = arith.constant 0 : i32
    %12 = arith.cmpi ne, %11, %c0_i32_4 : i32
    scf.if %12 {
      %c0_i32_11 = arith.constant 0 : i32
      %c4_i32 = arith.constant 4 : i32
      %22 = arith.muli %c0_i32_11, %c4_i32 : i32
      %23 = tpu.assume_multiple %22, 4 : i32
      %c0_12 = arith.constant 0 : index
      %c0_13 = arith.constant 0 : index
      %24 = arith.index_cast %23 : i32 to index
      %c0_14 = arith.constant 0 : index
      %25 = vector.load %arg3[%c0_12, %c0_13, %24, %c0_14] : memref<1x1x4x256xf32, #tpu.memory_space<vmem>>, vector<1x1x1x256xf32>
      %26 = vector.shape_cast %25 : vector<1x1x1x256xf32> to vector<1x256xf32>
      %27 = vector.broadcast %26 : vector<1x256xf32> to vector<64x256xf32>
      %28 = arith.subf %27, %5 : vector<64x256xf32>
      %29 = arith.mulf %28, %28 : vector<64x256xf32>
      %cst = arith.constant -72.1347503 : f32
      %30 = vector.broadcast %cst : f32 to vector<64x256xf32>
      %31 = arith.mulf %29, %30 : vector<64x256xf32>
      %32 = math.exp2 %31 : vector<64x256xf32>
      %c1_i32_15 = arith.constant 1 : i32
      %33 = arith.addi %23, %c1_i32_15 : i32
      %c0_16 = arith.constant 0 : index
      %c0_17 = arith.constant 0 : index
      %34 = arith.index_cast %33 : i32 to index
      %c0_18 = arith.constant 0 : index
      %35 = vector.load %arg3[%c0_16, %c0_17, %34, %c0_18] : memref<1x1x4x256xf32, #tpu.memory_space<vmem>>, vector<1x1x1x256xf32>
      %36 = vector.shape_cast %35 : vector<1x1x1x256xf32> to vector<1x256xf32>
      %37 = vector.broadcast %36 : vector<1x256xf32> to vector<64x256xf32>
      %38 = arith.subf %37, %5 : vector<64x256xf32>
      %39 = arith.mulf %38, %38 : vector<64x256xf32>
      %cst_19 = arith.constant -72.1347503 : f32
      %40 = vector.broadcast %cst_19 : f32 to vector<64x256xf32>
      %41 = arith.mulf %39, %40 : vector<64x256xf32>
      %42 = math.exp2 %41 : vector<64x256xf32>
      %43 = arith.addf %32, %42 : vector<64x256xf32>
      %c2_i32 = arith.constant 2 : i32
      %44 = arith.addi %23, %c2_i32 : i32
      %c0_20 = arith.constant 0 : index
      %c0_21 = arith.constant 0 : index
      %45 = arith.index_cast %44 : i32 to index
      %c0_22 = arith.constant 0 : index
      %46 = vector.load %arg3[%c0_20, %c0_21, %45, %c0_22] : memref<1x1x4x256xf32, #tpu.memory_space<vmem>>, vector<1x1x1x256xf32>
      %47 = vector.shape_cast %46 : vector<1x1x1x256xf32> to vector<1x256xf32>
      %48 = vector.broadcast %47 : vector<1x256xf32> to vector<64x256xf32>
      %49 = arith.subf %48, %5 : vector<64x256xf32>
      %50 = arith.mulf %49, %49 : vector<64x256xf32>
      %cst_23 = arith.constant -72.1347503 : f32
      %51 = vector.broadcast %cst_23 : f32 to vector<64x256xf32>
      %52 = arith.mulf %50, %51 : vector<64x256xf32>
      %53 = math.exp2 %52 : vector<64x256xf32>
      %54 = arith.addf %43, %53 : vector<64x256xf32>
      %c3_i32 = arith.constant 3 : i32
      %55 = arith.addi %23, %c3_i32 : i32
      %c0_24 = arith.constant 0 : index
      %c0_25 = arith.constant 0 : index
      %56 = arith.index_cast %55 : i32 to index
      %c0_26 = arith.constant 0 : index
      %57 = vector.load %arg3[%c0_24, %c0_25, %56, %c0_26] : memref<1x1x4x256xf32, #tpu.memory_space<vmem>>, vector<1x1x1x256xf32>
      %58 = vector.shape_cast %57 : vector<1x1x1x256xf32> to vector<1x256xf32>
      %59 = vector.broadcast %58 : vector<1x256xf32> to vector<64x256xf32>
      %60 = arith.subf %59, %5 : vector<64x256xf32>
      %61 = arith.mulf %60, %60 : vector<64x256xf32>
      %cst_27 = arith.constant -72.1347503 : f32
      %62 = vector.broadcast %cst_27 : f32 to vector<64x256xf32>
      %63 = arith.mulf %61, %62 : vector<64x256xf32>
      %64 = math.exp2 %63 : vector<64x256xf32>
      %65 = arith.addf %54, %64 : vector<64x256xf32>
      %c0_28 = arith.constant 0 : index
      %c0_29 = arith.constant 0 : index
      %66 = vector.load %arg6[%c0_28, %c0_29] : memref<64x256xf32, #tpu.memory_space<vmem>>, vector<64x256xf32>
      %67 = arith.addf %66, %65 : vector<64x256xf32>
      %c0_30 = arith.constant 0 : index
      %c0_31 = arith.constant 0 : index
      %68 = vector.load %arg6[%c0_30, %c0_31] : memref<64x256xf32, #tpu.memory_space<vmem>>, vector<64x256xf32>
      tpu.vector_store %arg6[%c0_30, %c0_31], %67 {strides = array<i32>} : memref<64x256xf32, #tpu.memory_space<vmem>>, vector<64x256xf32>,
      %c1_i32_32 = arith.constant 1 : i32
    } else {
    }
    %c1024_i32_5 = arith.constant 1024 : i32
    %13 = arith.cmpi slt, %8, %c1024_i32_5 : i32
    %c1024_i32_6 = arith.constant 1024 : i32
    %14 = arith.addi %8, %c1024_i32_6 : i32
    %c1024_i32_7 = arith.constant 1024 : i32
    %15 = arith.cmpi sgt, %14, %c1024_i32_7 : i32
    %16 = arith.andi %13, %15 : i1
    %17 = arith.extui %16 : i1 to i32
    %c0_i32_8 = arith.constant 0 : i32
    %18 = arith.cmpi ne, %17, %c0_i32_8 : i32
    scf.if %18 {
      %22 = tpu.iota {dimensions = array<i32: 1>} : vector<1x256xi32>
      %c0_i32_11 = arith.constant 0 : i32
      %c4_i32 = arith.constant 4 : i32
      %23 = arith.muli %c0_i32_11, %c4_i32 : i32
      %24 = tpu.assume_multiple %23, 4 : i32
      %c0_i32_12 = arith.constant 0 : i32
      %25 = arith.addi %24, %c0_i32_12 : i32
      %c0_13 = arith.constant 0 : index
      %c0_14 = arith.constant 0 : index
      %26 = arith.index_cast %25 : i32 to index
      %c0_15 = arith.constant 0 : index
      %27 = vector.load %arg3[%c0_13, %c0_14, %26, %c0_15] : memref<1x1x4x256xf32, #tpu.memory_space<vmem>>, vector<1x1x1x256xf32>
      %28 = vector.shape_cast %27 : vector<1x1x1x256xf32> to vector<1x256xf32>
      %29 = vector.broadcast %28 : vector<1x256xf32> to vector<64x256xf32>
      %30 = arith.subf %29, %5 : vector<64x256xf32>
      %31 = arith.mulf %30, %30 : vector<64x256xf32>
      %cst = arith.constant -72.1347503 : f32
      %32 = vector.broadcast %cst : f32 to vector<64x256xf32>
      %33 = arith.mulf %31, %32 : vector<64x256xf32>
      %34 = math.exp2 %33 : vector<64x256xf32>
      %c256_i32 = arith.constant 256 : i32
      %35 = arith.muli %25, %c256_i32 : i32
      %36 = arith.addi %8, %35 : i32
      %c1024_i32_16 = arith.constant 1024 : i32
      %37 = arith.subi %c1024_i32_16, %36 : i32
      %38 = vector.broadcast %37 : i32 to vector<1x256xi32>
      %39 = arith.cmpi slt, %22, %38 : vector<1x256xi32>
      %cst_17 = arith.constant 0.000000e+00 : f32
      %40 = vector.shape_cast %39 : vector<1x256xi1> to vector<1x256xi1>
      %41 = vector.broadcast %40 : vector<1x256xi1> to vector<64x256xi1>
      %42 = vector.broadcast %cst_17 : f32 to vector<64x256xf32>
      %43 = arith.select %41, %34, %42 : vector<64x256xi1>, vector<64x256xf32>
      %c1_i32_18 = arith.constant 1 : i32
      %44 = arith.addi %24, %c1_i32_18 : i32
      %c0_19 = arith.constant 0 : index
      %c0_20 = arith.constant 0 : index
      %45 = arith.index_cast %44 : i32 to index
      %c0_21 = arith.constant 0 : index
      %46 = vector.load %arg3[%c0_19, %c0_20, %45, %c0_21] : memref<1x1x4x256xf32, #tpu.memory_space<vmem>>, vector<1x1x1x256xf32>
      %47 = vector.shape_cast %46 : vector<1x1x1x256xf32> to vector<1x256xf32>
      %48 = vector.broadcast %47 : vector<1x256xf32> to vector<64x256xf32>
      %49 = arith.subf %48, %5 : vector<64x256xf32>
      %50 = arith.mulf %49, %49 : vector<64x256xf32>
      %cst_22 = arith.constant -72.1347503 : f32
      %51 = vector.broadcast %cst_22 : f32 to vector<64x256xf32>
      %52 = arith.mulf %50, %51 : vector<64x256xf32>
      %53 = math.exp2 %52 : vector<64x256xf32>
      %c256_i32_23 = arith.constant 256 : i32
      %54 = arith.muli %44, %c256_i32_23 : i32
      %55 = arith.addi %8, %54 : i32
      %c1024_i32_24 = arith.constant 1024 : i32
      %56 = arith.subi %c1024_i32_24, %55 : i32
      %57 = vector.broadcast %56 : i32 to vector<1x256xi32>
      %58 = arith.cmpi slt, %22, %57 : vector<1x256xi32>
      %cst_25 = arith.constant 0.000000e+00 : f32
      %59 = vector.shape_cast %58 : vector<1x256xi1> to vector<1x256xi1>
      %60 = vector.broadcast %59 : vector<1x256xi1> to vector<64x256xi1>
      %61 = vector.broadcast %cst_25 : f32 to vector<64x256xf32>
      %62 = arith.select %60, %53, %61 : vector<64x256xi1>, vector<64x256xf32>
      %63 = arith.addf %43, %62 : vector<64x256xf32>
      %c2_i32 = arith.constant 2 : i32
      %64 = arith.addi %24, %c2_i32 : i32
      %c0_26 = arith.constant 0 : index
      %c0_27 = arith.constant 0 : index
      %65 = arith.index_cast %64 : i32 to index
      %c0_28 = arith.constant 0 : index
      %66 = vector.load %arg3[%c0_26, %c0_27, %65, %c0_28] : memref<1x1x4x256xf32, #tpu.memory_space<vmem>>, vector<1x1x1x256xf32>
      %67 = vector.shape_cast %66 : vector<1x1x1x256xf32> to vector<1x256xf32>
      %68 = vector.broadcast %67 : vector<1x256xf32> to vector<64x256xf32>
      %69 = arith.subf %68, %5 : vector<64x256xf32>
      %70 = arith.mulf %69, %69 : vector<64x256xf32>
      %cst_29 = arith.constant -72.1347503 : f32
      %71 = vector.broadcast %cst_29 : f32 to vector<64x256xf32>
      %72 = arith.mulf %70, %71 : vector<64x256xf32>
      %73 = math.exp2 %72 : vector<64x256xf32>
      %c256_i32_30 = arith.constant 256 : i32
      %74 = arith.muli %64, %c256_i32_30 : i32
      %75 = arith.addi %8, %74 : i32
      %c1024_i32_31 = arith.constant 1024 : i32
      %76 = arith.subi %c1024_i32_31, %75 : i32
      %77 = vector.broadcast %76 : i32 to vector<1x256xi32>
      %78 = arith.cmpi slt, %22, %77 : vector<1x256xi32>
      %cst_32 = arith.constant 0.000000e+00 : f32
      %79 = vector.shape_cast %78 : vector<1x256xi1> to vector<1x256xi1>
      %80 = vector.broadcast %79 : vector<1x256xi1> to vector<64x256xi1>
      %81 = vector.broadcast %cst_32 : f32 to vector<64x256xf32>
      %82 = arith.select %80, %73, %81 : vector<64x256xi1>, vector<64x256xf32>
      %83 = arith.addf %63, %82 : vector<64x256xf32>
      %c3_i32 = arith.constant 3 : i32
      %84 = arith.addi %24, %c3_i32 : i32
      %c0_33 = arith.constant 0 : index
      %c0_34 = arith.constant 0 : index
      %85 = arith.index_cast %84 : i32 to index
      %c0_35 = arith.constant 0 : index
      %86 = vector.load %arg3[%c0_33, %c0_34, %85, %c0_35] : memref<1x1x4x256xf32, #tpu.memory_space<vmem>>, vector<1x1x1x256xf32>
      %87 = vector.shape_cast %86 : vector<1x1x1x256xf32> to vector<1x256xf32>
      %88 = vector.broadcast %87 : vector<1x256xf32> to vector<64x256xf32>
      %89 = arith.subf %88, %5 : vector<64x256xf32>
      %90 = arith.mulf %89, %89 : vector<64x256xf32>
      %cst_36 = arith.constant -72.1347503 : f32
      %91 = vector.broadcast %cst_36 : f32 to vector<64x256xf32>
      %92 = arith.mulf %90, %91 : vector<64x256xf32>
      %93 = math.exp2 %92 : vector<64x256xf32>
      %c256_i32_37 = arith.constant 256 : i32
      %94 = arith.muli %84, %c256_i32_37 : i32
      %95 = arith.addi %8, %94 : i32
      %c1024_i32_38 = arith.constant 1024 : i32
      %96 = arith.subi %c1024_i32_38, %95 : i32
      %97 = vector.broadcast %96 : i32 to vector<1x256xi32>
      %98 = arith.cmpi slt, %22, %97 : vector<1x256xi32>
      %cst_39 = arith.constant 0.000000e+00 : f32
      %99 = vector.shape_cast %98 : vector<1x256xi1> to vector<1x256xi1>
      %100 = vector.broadcast %99 : vector<1x256xi1> to vector<64x256xi1>
      %101 = vector.broadcast %cst_39 : f32 to vector<64x256xf32>
      %102 = arith.select %100, %93, %101 : vector<64x256xi1>, vector<64x256xf32>
      %103 = arith.addf %83, %102 : vector<64x256xf32>
      %c0_40 = arith.constant 0 : index
      %c0_41 = arith.constant 0 : index
      %104 = vector.load %arg6[%c0_40, %c0_41] : memref<64x256xf32, #tpu.memory_space<vmem>>, vector<64x256xf32>
      %105 = arith.addf %104, %103 : vector<64x256xf32>
      %c0_42 = arith.constant 0 : index
      %c0_43 = arith.constant 0 : index
      %106 = vector.load %arg6[%c0_42, %c0_43] : memref<64x256xf32, #tpu.memory_space<vmem>>, vector<64x256xf32>
      tpu.vector_store %arg6[%c0_42, %c0_43], %105 {strides = array<i32>} : memref<64x256xf32, #tpu.memory_space<vmem>>, vector<64x256xf32>,
      %c1_i32_44 = arith.constant 1 : i32
    } else {
    }
    %c0_i32_9 = arith.constant 0 : i32
    %19 = arith.cmpi eq, %arg2, %c0_i32_9 : i32
    %20 = arith.extui %19 : i1 to i32
    %c0_i32_10 = arith.constant 0 : i32
    %21 = arith.cmpi ne, %20, %c0_i32_10 : i32
    scf.if %21 {
      %c0_11 = arith.constant 0 : index
      %c0_12 = arith.constant 0 : index
      %22 = vector.load %arg6[%c0_11, %c0_12] : memref<64x256xf32, #tpu.memory_space<vmem>>, vector<64x256xf32>
      %cst = arith.constant dense<0.000000e+00> : vector<64xf32>
      %23 = vector.multi_reduction <add>, %22, %cst [1] : vector<64x256xf32> to vector<64xf32>
      %24 = vector.shape_cast %23 : vector<64xf32> to vector<64x1xf32>
      %cst_13 = arith.constant 0.374008387 : f32
      %25 = vector.broadcast %cst_13 : f32 to vector<64x1xf32>
      %26 = arith.mulf %24, %25 : vector<64x1xf32>
      %c0_14 = arith.constant 0 : index
      %c0_15 = arith.constant 0 : index
      %c0_16 = arith.constant 0 : index
      %27 = vector.load %arg5[%c0_14, %c0_15, %c0_16] : memref<1x64x1xf32, #tpu.memory_space<vmem>>, vector<1x64x1xf32>
      %28 = vector.shape_cast %27 : vector<1x64x1xf32> to vector<64x1xf32>
      %29 = vector.shape_cast %26 : vector<64x1xf32> to vector<1x64x1xf32>
      tpu.vector_store %arg5[%c0_14, %c0_15, %c0_16], %29 {strides = array<i32>} : memref<1x64x1xf32, #tpu.memory_space<vmem>>, vector<1x64x1xf32>,
    } else {
    }
    return
  }
  func.func @transform_0(%arg0: i32, %arg1: i32, %arg2: i32) -> (i32, i32, i32, i32) {
    %c0_i32 = arith.constant 0 : i32
    %c0_i32_0 = arith.constant 0 : i32
    %c0_i32_1 = arith.constant 0 : i32
    return %arg0, %arg2, %c0_i32, %c0_i32_0 : i32, i32, i32, i32
  }
  func.func @transform_1(%arg0: i32, %arg1: i32, %arg2: i32) -> (i32, i32) {
    %c0_i32 = arith.constant 0 : i32
    %c0_i32_0 = arith.constant 0 : i32
    return %arg1, %c0_i32 : i32, i32
  }
  func.func @transform_2(%arg0: i32, %arg1: i32, %arg2: i32) -> (i32, i32, i32) {
    %c0_i32 = arith.constant 0 : i32
    %c0_i32_0 = arith.constant 0 : i32
    return %arg0, %arg1, %c0_i32 : i32, i32, i32
  }
}

module attributes {stable_mosaic.version = 11 : i64} {
  func.func @_hist_kernel(%arg0: i32, %arg1: i32, %arg2: i32, %arg3: memref<1x1x4x256xf32, #tpu.memory_space<vmem>>, %arg4: memref<64x1xf32, #tpu.memory_space<vmem>>, %arg5: memref<1x64x1xf32, #tpu.memory_space<vmem>>, %arg6: memref<64x256xf32, #tpu.memory_space<vmem>>) attributes {dimension_semantics = [#tpu.dimension_semantics<parallel>, #tpu.dimension_semantics<arbitrary>, #tpu.dimension_semantics<arbitrary>], iteration_bounds = array<i64: 1, 1, 1>, scalar_prefetch = 0 : i64, scratch_operands = 1 : i64, tpu.core_type = #tpu.core_type<tc>, window_params = [{transform_indices = @transform_0, window_bounds = array<i64: 1, 1, 4, 256>}, {transform_indices = @transform_1, window_bounds = array<i64: 64, 1>}, {transform_indices = @transform_2, window_bounds = array<i64: 1, 64, 1>}]} {
    %c0_i32 = arith.constant 0 : i32
    %0 = arith.cmpi eq, %arg2, %c0_i32 : i32
    %1 = arith.extui %0 : i1 to i32
    %c0_i32_0 = arith.constant 0 : i32
    %2 = arith.cmpi ne, %1, %c0_i32_0 : i32
    scf.if %2 {
      %cst = arith.constant 0.000000e+00 : f32
      %22 = vector.broadcast %cst : f32 to vector<64x256xf32>
      %c0_11 = arith.constant 0 : index
      %c0_12 = arith.constant 0 : index
      %23 = vector.load %arg6[%c0_11, %c0_12] : memref<64x256xf32, #tpu.memory_space<vmem>>, vector<64x256xf32>
      tpu.vector_store %arg6[%c0_11, %c0_12], %22 {strides = array<i32>} : memref<64x256xf32, #tpu.memory_space<vmem>>, vector<64x256xf32>,
    } else {
    }
    %c0 = arith.constant 0 : index
    %c0_1 = arith.constant 0 : index
    %3 = vector.load %arg4[%c0, %c0_1] : memref<64x1xf32, #tpu.memory_space<vmem>>, vector<64x1xf32>
    %4 = vector.shape_cast %3 : vector<64x1xf32> to vector<64x1xf32>
    %5 = vector.broadcast %4 : vector<64x1xf32> to vector<64x256xf32>
    %c1_i32 = arith.constant 1 : i32
    %6 = arith.muli %arg0, %c1_i32 : i32
    %7 = arith.addi %6, %arg2 : i32
    %c1024_i32 = arith.constant 1024 : i32
    %8 = arith.muli %7, %c1024_i32 : i32
    %c1024_i32_2 = arith.constant 1024 : i32
    %9 = arith.addi %8, %c1024_i32_2 : i32
    %c1024_i32_3 = arith.constant 1024 : i32
    %10 = arith.cmpi sle, %9, %c1024_i32_3 : i32
    %11 = arith.extui %10 : i1 to i32
    %c0_i32_4 = arith.constant 0 : i32
    %12 = arith.cmpi ne, %11, %c0_i32_4 : i32
    scf.if %12 {
      %c0_i32_11 = arith.constant 0 : i32
      %c4_i32 = arith.constant 4 : i32
      %22 = arith.muli %c0_i32_11, %c4_i32 : i32
      %23 = tpu.assume_multiple %22, 4 : i32
      %c0_12 = arith.constant 0 : index
      %c0_13 = arith.constant 0 : index
      %24 = arith.index_cast %23 : i32 to index
      %c0_14 = arith.constant 0 : index
      %25 = vector.load %arg3[%c0_12, %c0_13, %24, %c0_14] : memref<1x1x4x256xf32, #tpu.memory_space<vmem>>, vector<1x1x1x256xf32>
      %26 = vector.shape_cast %25 : vector<1x1x1x256xf32> to vector<1x256xf32>
      %27 = vector.broadcast %26 : vector<1x256xf32> to vector<64x256xf32>
      %28 = arith.subf %27, %5 : vector<64x256xf32>
      %29 = arith.mulf %28, %28 : vector<64x256xf32>
      %cst = arith.constant -5.000000e+01 : f32
      %30 = vector.broadcast %cst : f32 to vector<64x256xf32>
      %31 = arith.mulf %29, %30 : vector<64x256xf32>
      %32 = math.exp %31 : vector<64x256xf32>
      %c1_i32_15 = arith.constant 1 : i32
      %33 = arith.addi %23, %c1_i32_15 : i32
      %c0_16 = arith.constant 0 : index
      %c0_17 = arith.constant 0 : index
      %34 = arith.index_cast %33 : i32 to index
      %c0_18 = arith.constant 0 : index
      %35 = vector.load %arg3[%c0_16, %c0_17, %34, %c0_18] : memref<1x1x4x256xf32, #tpu.memory_space<vmem>>, vector<1x1x1x256xf32>
      %36 = vector.shape_cast %35 : vector<1x1x1x256xf32> to vector<1x256xf32>
      %37 = vector.broadcast %36 : vector<1x256xf32> to vector<64x256xf32>
      %38 = arith.subf %37, %5 : vector<64x256xf32>
      %39 = arith.mulf %38, %38 : vector<64x256xf32>
      %cst_19 = arith.constant -5.000000e+01 : f32
      %40 = vector.broadcast %cst_19 : f32 to vector<64x256xf32>
      %41 = arith.mulf %39, %40 : vector<64x256xf32>
      %42 = math.exp %41 : vector<64x256xf32>
      %43 = arith.addf %32, %42 : vector<64x256xf32>
      %c2_i32 = arith.constant 2 : i32
      %44 = arith.addi %23, %c2_i32 : i32
      %c0_20 = arith.constant 0 : index
      %c0_21 = arith.constant 0 : index
      %45 = arith.index_cast %44 : i32 to index
      %c0_22 = arith.constant 0 : index
      %46 = vector.load %arg3[%c0_20, %c0_21, %45, %c0_22] : memref<1x1x4x256xf32, #tpu.memory_space<vmem>>, vector<1x1x1x256xf32>
      %47 = vector.shape_cast %46 : vector<1x1x1x256xf32> to vector<1x256xf32>
      %48 = vector.broadcast %47 : vector<1x256xf32> to vector<64x256xf32>
      %49 = arith.subf %48, %5 : vector<64x256xf32>
      %50 = arith.mulf %49, %49 : vector<64x256xf32>
      %cst_23 = arith.constant -5.000000e+01 : f32
      %51 = vector.broadcast %cst_23 : f32 to vector<64x256xf32>
      %52 = arith.mulf %50, %51 : vector<64x256xf32>
      %53 = math.exp %52 : vector<64x256xf32>
      %54 = arith.addf %43, %53 : vector<64x256xf32>
      %c3_i32 = arith.constant 3 : i32
      %55 = arith.addi %23, %c3_i32 : i32
      %c0_24 = arith.constant 0 : index
      %c0_25 = arith.constant 0 : index
      %56 = arith.index_cast %55 : i32 to index
      %c0_26 = arith.constant 0 : index
      %57 = vector.load %arg3[%c0_24, %c0_25, %56, %c0_26] : memref<1x1x4x256xf32, #tpu.memory_space<vmem>>, vector<1x1x1x256xf32>
      %58 = vector.shape_cast %57 : vector<1x1x1x256xf32> to vector<1x256xf32>
      %59 = vector.broadcast %58 : vector<1x256xf32> to vector<64x256xf32>
      %60 = arith.subf %59, %5 : vector<64x256xf32>
      %61 = arith.mulf %60, %60 : vector<64x256xf32>
      %cst_27 = arith.constant -5.000000e+01 : f32
      %62 = vector.broadcast %cst_27 : f32 to vector<64x256xf32>
      %63 = arith.mulf %61, %62 : vector<64x256xf32>
      %64 = math.exp %63 : vector<64x256xf32>
      %65 = arith.addf %54, %64 : vector<64x256xf32>
      %c0_28 = arith.constant 0 : index
      %c0_29 = arith.constant 0 : index
      %66 = vector.load %arg6[%c0_28, %c0_29] : memref<64x256xf32, #tpu.memory_space<vmem>>, vector<64x256xf32>
      %67 = arith.addf %66, %65 : vector<64x256xf32>
      %c0_30 = arith.constant 0 : index
      %c0_31 = arith.constant 0 : index
      %68 = vector.load %arg6[%c0_30, %c0_31] : memref<64x256xf32, #tpu.memory_space<vmem>>, vector<64x256xf32>
      tpu.vector_store %arg6[%c0_30, %c0_31], %67 {strides = array<i32>} : memref<64x256xf32, #tpu.memory_space<vmem>>, vector<64x256xf32>,
      %c1_i32_32 = arith.constant 1 : i32
    } else {
    }
    %c1024_i32_5 = arith.constant 1024 : i32
    %13 = arith.cmpi slt, %8, %c1024_i32_5 : i32
    %c1024_i32_6 = arith.constant 1024 : i32
    %14 = arith.addi %8, %c1024_i32_6 : i32
    %c1024_i32_7 = arith.constant 1024 : i32
    %15 = arith.cmpi sgt, %14, %c1024_i32_7 : i32
    %16 = arith.andi %13, %15 : i1
    %17 = arith.extui %16 : i1 to i32
    %c0_i32_8 = arith.constant 0 : i32
    %18 = arith.cmpi ne, %17, %c0_i32_8 : i32
    scf.if %18 {
      %22 = tpu.iota {dimensions = array<i32: 1>} : vector<1x256xi32>
      %c0_i32_11 = arith.constant 0 : i32
      %c4_i32 = arith.constant 4 : i32
      %23 = arith.muli %c0_i32_11, %c4_i32 : i32
      %24 = tpu.assume_multiple %23, 4 : i32
      %c0_i32_12 = arith.constant 0 : i32
      %25 = arith.addi %24, %c0_i32_12 : i32
      %c0_13 = arith.constant 0 : index
      %c0_14 = arith.constant 0 : index
      %26 = arith.index_cast %25 : i32 to index
      %c0_15 = arith.constant 0 : index
      %27 = vector.load %arg3[%c0_13, %c0_14, %26, %c0_15] : memref<1x1x4x256xf32, #tpu.memory_space<vmem>>, vector<1x1x1x256xf32>
      %28 = vector.shape_cast %27 : vector<1x1x1x256xf32> to vector<1x256xf32>
      %29 = vector.broadcast %28 : vector<1x256xf32> to vector<64x256xf32>
      %30 = arith.subf %29, %5 : vector<64x256xf32>
      %31 = arith.mulf %30, %30 : vector<64x256xf32>
      %cst = arith.constant -5.000000e+01 : f32
      %32 = vector.broadcast %cst : f32 to vector<64x256xf32>
      %33 = arith.mulf %31, %32 : vector<64x256xf32>
      %34 = math.exp %33 : vector<64x256xf32>
      %c256_i32 = arith.constant 256 : i32
      %35 = arith.muli %25, %c256_i32 : i32
      %36 = arith.addi %8, %35 : i32
      %c1024_i32_16 = arith.constant 1024 : i32
      %37 = arith.subi %c1024_i32_16, %36 : i32
      %38 = vector.broadcast %37 : i32 to vector<1x256xi32>
      %39 = arith.cmpi slt, %22, %38 : vector<1x256xi32>
      %cst_17 = arith.constant 0.000000e+00 : f32
      %40 = vector.shape_cast %39 : vector<1x256xi1> to vector<1x256xi1>
      %41 = vector.broadcast %40 : vector<1x256xi1> to vector<64x256xi1>
      %42 = vector.broadcast %cst_17 : f32 to vector<64x256xf32>
      %43 = arith.select %41, %34, %42 : vector<64x256xi1>, vector<64x256xf32>
      %c1_i32_18 = arith.constant 1 : i32
      %44 = arith.addi %24, %c1_i32_18 : i32
      %c0_19 = arith.constant 0 : index
      %c0_20 = arith.constant 0 : index
      %45 = arith.index_cast %44 : i32 to index
      %c0_21 = arith.constant 0 : index
      %46 = vector.load %arg3[%c0_19, %c0_20, %45, %c0_21] : memref<1x1x4x256xf32, #tpu.memory_space<vmem>>, vector<1x1x1x256xf32>
      %47 = vector.shape_cast %46 : vector<1x1x1x256xf32> to vector<1x256xf32>
      %48 = vector.broadcast %47 : vector<1x256xf32> to vector<64x256xf32>
      %49 = arith.subf %48, %5 : vector<64x256xf32>
      %50 = arith.mulf %49, %49 : vector<64x256xf32>
      %cst_22 = arith.constant -5.000000e+01 : f32
      %51 = vector.broadcast %cst_22 : f32 to vector<64x256xf32>
      %52 = arith.mulf %50, %51 : vector<64x256xf32>
      %53 = math.exp %52 : vector<64x256xf32>
      %c256_i32_23 = arith.constant 256 : i32
      %54 = arith.muli %44, %c256_i32_23 : i32
      %55 = arith.addi %8, %54 : i32
      %c1024_i32_24 = arith.constant 1024 : i32
      %56 = arith.subi %c1024_i32_24, %55 : i32
      %57 = vector.broadcast %56 : i32 to vector<1x256xi32>
      %58 = arith.cmpi slt, %22, %57 : vector<1x256xi32>
      %cst_25 = arith.constant 0.000000e+00 : f32
      %59 = vector.shape_cast %58 : vector<1x256xi1> to vector<1x256xi1>
      %60 = vector.broadcast %59 : vector<1x256xi1> to vector<64x256xi1>
      %61 = vector.broadcast %cst_25 : f32 to vector<64x256xf32>
      %62 = arith.select %60, %53, %61 : vector<64x256xi1>, vector<64x256xf32>
      %63 = arith.addf %43, %62 : vector<64x256xf32>
      %c2_i32 = arith.constant 2 : i32
      %64 = arith.addi %24, %c2_i32 : i32
      %c0_26 = arith.constant 0 : index
      %c0_27 = arith.constant 0 : index
      %65 = arith.index_cast %64 : i32 to index
      %c0_28 = arith.constant 0 : index
      %66 = vector.load %arg3[%c0_26, %c0_27, %65, %c0_28] : memref<1x1x4x256xf32, #tpu.memory_space<vmem>>, vector<1x1x1x256xf32>
      %67 = vector.shape_cast %66 : vector<1x1x1x256xf32> to vector<1x256xf32>
      %68 = vector.broadcast %67 : vector<1x256xf32> to vector<64x256xf32>
      %69 = arith.subf %68, %5 : vector<64x256xf32>
      %70 = arith.mulf %69, %69 : vector<64x256xf32>
      %cst_29 = arith.constant -5.000000e+01 : f32
      %71 = vector.broadcast %cst_29 : f32 to vector<64x256xf32>
      %72 = arith.mulf %70, %71 : vector<64x256xf32>
      %73 = math.exp %72 : vector<64x256xf32>
      %c256_i32_30 = arith.constant 256 : i32
      %74 = arith.muli %64, %c256_i32_30 : i32
      %75 = arith.addi %8, %74 : i32
      %c1024_i32_31 = arith.constant 1024 : i32
      %76 = arith.subi %c1024_i32_31, %75 : i32
      %77 = vector.broadcast %76 : i32 to vector<1x256xi32>
      %78 = arith.cmpi slt, %22, %77 : vector<1x256xi32>
      %cst_32 = arith.constant 0.000000e+00 : f32
      %79 = vector.shape_cast %78 : vector<1x256xi1> to vector<1x256xi1>
      %80 = vector.broadcast %79 : vector<1x256xi1> to vector<64x256xi1>
      %81 = vector.broadcast %cst_32 : f32 to vector<64x256xf32>
      %82 = arith.select %80, %73, %81 : vector<64x256xi1>, vector<64x256xf32>
      %83 = arith.addf %63, %82 : vector<64x256xf32>
      %c3_i32 = arith.constant 3 : i32
      %84 = arith.addi %24, %c3_i32 : i32
      %c0_33 = arith.constant 0 : index
      %c0_34 = arith.constant 0 : index
      %85 = arith.index_cast %84 : i32 to index
      %c0_35 = arith.constant 0 : index
      %86 = vector.load %arg3[%c0_33, %c0_34, %85, %c0_35] : memref<1x1x4x256xf32, #tpu.memory_space<vmem>>, vector<1x1x1x256xf32>
      %87 = vector.shape_cast %86 : vector<1x1x1x256xf32> to vector<1x256xf32>
      %88 = vector.broadcast %87 : vector<1x256xf32> to vector<64x256xf32>
      %89 = arith.subf %88, %5 : vector<64x256xf32>
      %90 = arith.mulf %89, %89 : vector<64x256xf32>
      %cst_36 = arith.constant -5.000000e+01 : f32
      %91 = vector.broadcast %cst_36 : f32 to vector<64x256xf32>
      %92 = arith.mulf %90, %91 : vector<64x256xf32>
      %93 = math.exp %92 : vector<64x256xf32>
      %c256_i32_37 = arith.constant 256 : i32
      %94 = arith.muli %84, %c256_i32_37 : i32
      %95 = arith.addi %8, %94 : i32
      %c1024_i32_38 = arith.constant 1024 : i32
      %96 = arith.subi %c1024_i32_38, %95 : i32
      %97 = vector.broadcast %96 : i32 to vector<1x256xi32>
      %98 = arith.cmpi slt, %22, %97 : vector<1x256xi32>
      %cst_39 = arith.constant 0.000000e+00 : f32
      %99 = vector.shape_cast %98 : vector<1x256xi1> to vector<1x256xi1>
      %100 = vector.broadcast %99 : vector<1x256xi1> to vector<64x256xi1>
      %101 = vector.broadcast %cst_39 : f32 to vector<64x256xf32>
      %102 = arith.select %100, %93, %101 : vector<64x256xi1>, vector<64x256xf32>
      %103 = arith.addf %83, %102 : vector<64x256xf32>
      %c0_40 = arith.constant 0 : index
      %c0_41 = arith.constant 0 : index
      %104 = vector.load %arg6[%c0_40, %c0_41] : memref<64x256xf32, #tpu.memory_space<vmem>>, vector<64x256xf32>
      %105 = arith.addf %104, %103 : vector<64x256xf32>
      %c0_42 = arith.constant 0 : index
      %c0_43 = arith.constant 0 : index
      %106 = vector.load %arg6[%c0_42, %c0_43] : memref<64x256xf32, #tpu.memory_space<vmem>>, vector<64x256xf32>
      tpu.vector_store %arg6[%c0_42, %c0_43], %105 {strides = array<i32>} : memref<64x256xf32, #tpu.memory_space<vmem>>, vector<64x256xf32>,
      %c1_i32_44 = arith.constant 1 : i32
    } else {
    }
    %c0_i32_9 = arith.constant 0 : i32
    %19 = arith.cmpi eq, %arg2, %c0_i32_9 : i32
    %20 = arith.extui %19 : i1 to i32
    %c0_i32_10 = arith.constant 0 : i32
    %21 = arith.cmpi ne, %20, %c0_i32_10 : i32
    scf.if %21 {
      %c0_11 = arith.constant 0 : index
      %c0_12 = arith.constant 0 : index
      %22 = vector.load %arg6[%c0_11, %c0_12] : memref<64x256xf32, #tpu.memory_space<vmem>>, vector<64x256xf32>
      %cst = arith.constant dense<0.000000e+00> : vector<64xf32>
      %23 = vector.multi_reduction <add>, %22, %cst [1] : vector<64x256xf32> to vector<64xf32>
      %24 = vector.shape_cast %23 : vector<64xf32> to vector<64x1xf32>
      %cst_13 = arith.constant 0.374008387 : f32
      %25 = vector.broadcast %cst_13 : f32 to vector<64x1xf32>
      %26 = arith.mulf %24, %25 : vector<64x1xf32>
      %c0_14 = arith.constant 0 : index
      %c0_15 = arith.constant 0 : index
      %c0_16 = arith.constant 0 : index
      %27 = vector.load %arg5[%c0_14, %c0_15, %c0_16] : memref<1x64x1xf32, #tpu.memory_space<vmem>>, vector<1x64x1xf32>
      %28 = vector.shape_cast %27 : vector<1x64x1xf32> to vector<64x1xf32>
      %29 = vector.shape_cast %26 : vector<64x1xf32> to vector<1x64x1xf32>
      tpu.vector_store %arg5[%c0_14, %c0_15, %c0_16], %29 {strides = array<i32>} : memref<1x64x1xf32, #tpu.memory_space<vmem>>, vector<1x64x1xf32>,
    } else {
    }
    return
  }
  func.func @transform_0(%arg0: i32, %arg1: i32, %arg2: i32) -> (i32, i32, i32, i32) {
    %c0_i32 = arith.constant 0 : i32
    %c0_i32_0 = arith.constant 0 : i32
    %c0_i32_1 = arith.constant 0 : i32
    return %arg0, %arg2, %c0_i32, %c0_i32_0 : i32, i32, i32, i32
  }
  func.func @transform_1(%arg0: i32, %arg1: i32, %arg2: i32) -> (i32, i32) {
    %c0_i32 = arith.constant 0 : i32
    %c0_i32_0 = arith.constant 0 : i32
    return %arg1, %c0_i32 : i32, i32
  }
  func.func @transform_2(%arg0: i32, %arg1: i32, %arg2: i32) -> (i32, i32, i32) {
    %c0_i32 = arith.constant 0 : i32
    %c0_i32_0 = arith.constant 0 : i32
    return %arg0, %arg1, %c0_i32 : i32, i32, i32
  }
}

</mosaic_0001>

<llo_original>
// kernel: tpu_custom_call.1
$region0: #{tpu_custom_call.1}
  #allocation0 [shape = 'u32[]', space=smem, size = 0x4, offset = 0x4, fixed_abs, tag = 'smem constant byte address 0x4 - core index']
  #allocation1 [shape = 'u32[72,128]{1,0:T(1,128)}', space=vmem, size = 0x9000, scoped, tag = 'internal scratch']
  #allocation2 [shape = 'f32[64,256]{1,0:T(8,128)}', space=vmem, size = 0x10000, scoped, tag = 'scratch operand']
  %s0 = inlined_call_operand.vmem [shape: f32[1,1,4,256], index: 0, kind: input, shape index: {}]
  %s1 = inlined_call_operand.vmem [shape: f32[64,1], index: 1, kind: input, shape index: {}]
  %s2 = inlined_call_operand.vmem [shape: f32[1,64,1], index: 2, kind: output, shape index: {}]
  %s3 = sld [smem:[#allocation0]]
  $region34: #{tpu_custom_call.1} parent=0
    _
  %s5 = ssub.s32 1, %s3
  %s6 = scalar_select 0, %s5, %s3
  // Predicated region
  $region2: #{tpu_custom_call.1} parent=0 // pred_check
    _
  $region3: #{tpu_custom_call.1} parent=0 // pred_check_branch
    %8 = sbr.rel (0) target = $region5
  $region4: #{tpu_custom_call.1} parent=0 // pred_region
    _
  $region5: #{tpu_custom_call.1} parent=0 // pred_fallthru
    _
  // Predicated region
  $region6: #{tpu_custom_call.1} parent=0 // pred_check
    _
  $region7: #{tpu_custom_call.1} parent=0 // pred_check_branch
    %10 = sbr.rel (0) target = $region9
  $region8: #{tpu_custom_call.1} parent=0 // pred_region
    _
  $region9: #{tpu_custom_call.1} parent=0 // pred_fallthru
    _
  %p11 = scmp.eq.s32.totalorder 0, 0
  // Predicated region
  $region10: #{tpu_custom_call.1} parent=0 // pred_check
    %p12 = pneg %p11
  $region11: #{tpu_custom_call.1} parent=0 // pred_check_branch
    %14 = sbr.rel (%p12) target = $region13
  $region12: #{tpu_custom_call.1} parent=0 // pred_region
    %15 = vst [vmem:[#allocation2] sm:$0xff] 0.0
    %16 = vst [vmem:[#allocation2 + $0x8] sm:$0xff] 0.0
    %17 = vst [vmem:[#allocation2 + $0x10] sm:$0xff] 0.0
    %18 = vst [vmem:[#allocation2 + $0x18] sm:$0xff] 0.0
    %19 = vst [vmem:[#allocation2 + $0x20] sm:$0xff] 0.0
    %20 = vst [vmem:[#allocation2 + $0x28] sm:$0xff] 0.0
    %21 = vst [vmem:[#allocation2 + $0x30] sm:$0xff] 0.0
    %22 = vst [vmem:[#allocation2 + $0x38] sm:$0xff] 0.0
    %23 = vst [vmem:[#allocation2 + $0x40] sm:$0xff] 0.0
    %24 = vst [vmem:[#allocation2 + $0x48] sm:$0xff] 0.0
    %25 = vst [vmem:[#allocation2 + $0x50] sm:$0xff] 0.0
    %26 = vst [vmem:[#allocation2 + $0x58] sm:$0xff] 0.0
    %27 = vst [vmem:[#allocation2 + $0x60] sm:$0xff] 0.0
    %28 = vst [vmem:[#allocation2 + $0x68] sm:$0xff] 0.0
    %29 = vst [vmem:[#allocation2 + $0x70] sm:$0xff] 0.0
    %30 = vst [vmem:[#allocation2 + $0x78] sm:$0xff] 0.0
  $region13: #{tpu_custom_call.1} parent=0 // pred_fallthru
    _
  %v31 = vld [vmem:[%s1] sm:$0xff]
  %v32 = vld [vmem:[%s1 + $0x8] sm:$0xff]
  %v33 = vld [vmem:[%s1 + $0x10] sm:$0xff]
  %v34 = vld [vmem:[%s1 + $0x18] sm:$0xff]
  %v35 = vld [vmem:[%s1 + $0x20] sm:$0xff]
  %v36 = vld [vmem:[%s1 + $0x28] sm:$0xff]
  %v37 = vld [vmem:[%s1 + $0x30] sm:$0xff]
  %v38 = vld [vmem:[%s1 + $0x38] sm:$0xff]
  %40 = vset.pattern.permute.xlu0 0
  %41 = vperm.xlu0 %40, %v31
  %v42 = vpop.permute.xlu0 %41
  %45 = vset.pattern.permute.xlu0 0
  %46 = vperm.xlu0 %45, %v32
  %v47 = vpop.permute.xlu0 %46
  %50 = vset.pattern.permute.xlu0 0
  %51 = vperm.xlu0 %50, %v33
  %v52 = vpop.permute.xlu0 %51
  %55 = vset.pattern.permute.xlu0 0
  %56 = vperm.xlu0 %55, %v34
  %v57 = vpop.permute.xlu0 %56
  %60 = vset.pattern.permute.xlu0 0
  %61 = vperm.xlu0 %60, %v35
  %v62 = vpop.permute.xlu0 %61
  %65 = vset.pattern.permute.xlu0 0
  %66 = vperm.xlu0 %65, %v36
  %v67 = vpop.permute.xlu0 %66
  %70 = vset.pattern.permute.xlu0 0
  %71 = vperm.xlu0 %70, %v37
  %v72 = vpop.permute.xlu0 %71
  %75 = vset.pattern.permute.xlu0 0
  %76 = vperm.xlu0 %75, %v38
  %v77 = vpop.permute.xlu0 %76
  %s79 = sadd.s32 0, 0
  %s80 = smul.u32 %s79, 1024
  %s81 = sadd.s32 %s80, 1024
  %p82 = scmp.le.s32.totalorder %s81, 1024
  // Predicated region
  $region14: #{tpu_custom_call.1} parent=0 // pred_check
    %p83 = pneg %p82
  $region15: #{tpu_custom_call.1} parent=0 // pred_check_branch
    %85 = sbr.rel (%p83) target = $region17
  $region16: #{tpu_custom_call.1} parent=0 // pred_region
    %s86 = smul.u32 0, 2
    %s87 = smul.addr %s86, 4
    %s88 = scalar_lea.vmem %s0, %s87
    %v89 = vld [vmem:[%s88] ss:$4 sm:$0x3]
    %v91 = vperm.slane %v89, 0
    %v92 = vperm.slane %v89, 1
    %v95 = vsub.f32 %v91, %v42
    %v96 = vsub.f32 %v92, %v42
    %v97 = vsub.f32 %v91, %v47
    %v98 = vsub.f32 %v92, %v47
    %v99 = vsub.f32 %v91, %v52
    %v100 = vsub.f32 %v92, %v52
    %v101 = vsub.f32 %v91, %v57
    %v102 = vsub.f32 %v92, %v57
    %v103 = vsub.f32 %v91, %v62
    %v104 = vsub.f32 %v92, %v62
    %v105 = vsub.f32 %v91, %v67
    %v106 = vsub.f32 %v92, %v67
    %v107 = vsub.f32 %v91, %v72
    %v108 = vsub.f32 %v92, %v72
    %v109 = vsub.f32 %v91, %v77
    %v110 = vsub.f32 %v92, %v77
    %v111 = vmul.f32 %v95, %v95
    %v112 = vmul.f32 %v96, %v96
    %v113 = vmul.f32 %v97, %v97
    %v114 = vmul.f32 %v98, %v98
    %v115 = vmul.f32 %v99, %v99
    %v116 = vmul.f32 %v100, %v100
    %v117 = vmul.f32 %v101, %v101
    %v118 = vmul.f32 %v102, %v102
    %v119 = vmul.f32 %v103, %v103
    %v120 = vmul.f32 %v104, %v104
    %v121 = vmul.f32 %v105, %v105
    %v122 = vmul.f32 %v106, %v106
    %v123 = vmul.f32 %v107, %v107
    %v124 = vmul.f32 %v108, %v108
    %v125 = vmul.f32 %v109, %v109
    %v126 = vmul.f32 %v110, %v110
    %v127 = vmul.f32 %v111, -72.13475
    %v128 = vmul.f32 %v112, -72.13475
    %v129 = vmul.f32 %v113, -72.13475
    %v130 = vmul.f32 %v114, -72.13475
    %v131 = vmul.f32 %v115, -72.13475
    %v132 = vmul.f32 %v116, -72.13475
    %v133 = vmul.f32 %v117, -72.13475
    %v134 = vmul.f32 %v118, -72.13475
    %v135 = vmul.f32 %v119, -72.13475
    %v136 = vmul.f32 %v120, -72.13475
    %v137 = vmul.f32 %v121, -72.13475
    %v138 = vmul.f32 %v122, -72.13475
    %v139 = vmul.f32 %v123, -72.13475
    %v140 = vmul.f32 %v124, -72.13475
    %v141 = vmul.f32 %v125, -72.13475
    %v142 = vmul.f32 %v126, -72.13475
    %v143 = vpow.pop %v127
    %v144 = vpow.pop %v128
    %v145 = vpow.pop %v129
    %v146 = vpow.pop %v130
    %v147 = vpow.pop %v131
    %v148 = vpow.pop %v132
    %v149 = vpow.pop %v133
    %v150 = vpow.pop %v134
    %v151 = vpow.pop %v135
    %v152 = vpow.pop %v136
    %v153 = vpow.pop %v137
    %v154 = vpow.pop %v138
    %v155 = vpow.pop %v139
    %v156 = vpow.pop %v140
    %v157 = vpow.pop %v141
    %v158 = vpow.pop %v142
    %s159 = sadd.s32 0, 1
    %s160 = sshra.s32 %s159, 2
    %s161 = sand.u32 %s159, 3
    %s162 = sshra.s32 %s159, 2
    %s163 = sand.u32 %s159, 3
    %s164 = smul.u32 %s160, 2
    %s165 = smul.u32 %s164, 4
    %s166 = sadd.s32 %s165, %s163
    %s167 = scalar_lea.vmem %s0, %s166
    %v168 = vld [vmem:[%s167] ss:$4 sm:$0x3]
    %v170 = vperm.slane %v168, 0
    %v171 = vperm.slane %v168, 1
    %v174 = vsub.f32 %v170, %v42
    %v175 = vsub.f32 %v171, %v42
    %v176 = vsub.f32 %v170, %v47
    %v177 = vsub.f32 %v171, %v47
    %v178 = vsub.f32 %v170, %v52
    %v179 = vsub.f32 %v171, %v52
    %v180 = vsub.f32 %v170, %v57
    %v181 = vsub.f32 %v171, %v57
    %v182 = vsub.f32 %v170, %v62
    %v183 = vsub.f32 %v171, %v62
    %v184 = vsub.f32 %v170, %v67
    %v185 = vsub.f32 %v171, %v67
    %v186 = vsub.f32 %v170, %v72
    %v187 = vsub.f32 %v171, %v72
    %v188 = vsub.f32 %v170, %v77
    %v189 = vsub.f32 %v171, %v77
    %v190 = vmul.f32 %v174, %v174
    %v191 = vmul.f32 %v175, %v175
    %v192 = vmul.f32 %v176, %v176
    %v193 = vmul.f32 %v177, %v177
    %v194 = vmul.f32 %v178, %v178
    %v195 = vmul.f32 %v179, %v179
    %v196 = vmul.f32 %v180, %v180
    %v197 = vmul.f32 %v181, %v181
    %v198 = vmul.f32 %v182, %v182
    %v199 = vmul.f32 %v183, %v183
    %v200 = vmul.f32 %v184, %v184
    %v201 = vmul.f32 %v185, %v185
    %v202 = vmul.f32 %v186, %v186
    %v203 = vmul.f32 %v187, %v187
    %v204 = vmul.f32 %v188, %v188
    %v205 = vmul.f32 %v189, %v189
    %v206 = vmul.f32 %v190, -72.13475
    %v207 = vmul.f32 %v191, -72.13475
    %v208 = vmul.f32 %v192, -72.13475
    %v209 = vmul.f32 %v193, -72.13475
    %v210 = vmul.f32 %v194, -72.13475
    %v211 = vmul.f32 %v195, -72.13475
    %v212 = vmul.f32 %v196, -72.13475
    %v213 = vmul.f32 %v197, -72.13475
    %v214 = vmul.f32 %v198, -72.13475
    %v215 = vmul.f32 %v199, -72.13475
    %v216 = vmul.f32 %v200, -72.13475
    %v217 = vmul.f32 %v201, -72.13475
    %v218 = vmul.f32 %v202, -72.13475
    %v219 = vmul.f32 %v203, -72.13475
    %v220 = vmul.f32 %v204, -72.13475
    %v221 = vmul.f32 %v205, -72.13475
    %v222 = vpow.pop %v206
    %v223 = vpow.pop %v207
    %v224 = vpow.pop %v208
    %v225 = vpow.pop %v209
    %v226 = vpow.pop %v210
    %v227 = vpow.pop %v211
    %v228 = vpow.pop %v212
    %v229 = vpow.pop %v213
    %v230 = vpow.pop %v214
    %v231 = vpow.pop %v215
    %v232 = vpow.pop %v216
    %v233 = vpow.pop %v217
    %v234 = vpow.pop %v218
    %v235 = vpow.pop %v219
    %v236 = vpow.pop %v220
    %v237 = vpow.pop %v221
    %v238 = vadd.f32 %v143, %v222
    %v239 = vadd.f32 %v144, %v223
    %v240 = vadd.f32 %v145, %v224
    %v241 = vadd.f32 %v146, %v225
    %v242 = vadd.f32 %v147, %v226
    %v243 = vadd.f32 %v148, %v227
    %v244 = vadd.f32 %v149, %v228
    %v245 = vadd.f32 %v150, %v229
    %v246 = vadd.f32 %v151, %v230
    %v247 = vadd.f32 %v152, %v231
    %v248 = vadd.f32 %v153, %v232
    %v249 = vadd.f32 %v154, %v233
    %v250 = vadd.f32 %v155, %v234
    %v251 = vadd.f32 %v156, %v235
    %v252 = vadd.f32 %v157, %v236
    %v253 = vadd.f32 %v158, %v237
    %s254 = sadd.s32 0, 2
    %s255 = sshra.s32 %s254, 2
    %s256 = sand.u32 %s254, 3
    %s257 = sshra.s32 %s254, 2
    %s258 = sand.u32 %s254, 3
    %s259 = smul.u32 %s255, 2
    %s260 = smul.u32 %s259, 4
    %s261 = sadd.s32 %s260, %s258
    %s262 = scalar_lea.vmem %s0, %s261
    %v263 = vld [vmem:[%s262] ss:$4 sm:$0x3]
    %v265 = vperm.slane %v263, 0
    %v266 = vperm.slane %v263, 1
    %v269 = vsub.f32 %v265, %v42
    %v270 = vsub.f32 %v266, %v42
    %v271 = vsub.f32 %v265, %v47
    %v272 = vsub.f32 %v266, %v47
    %v273 = vsub.f32 %v265, %v52
    %v274 = vsub.f32 %v266, %v52
    %v275 = vsub.f32 %v265, %v57
    %v276 = vsub.f32 %v266, %v57
    %v277 = vsub.f32 %v265, %v62
    %v278 = vsub.f32 %v266, %v62
    %v279 = vsub.f32 %v265, %v67
    %v280 = vsub.f32 %v266, %v67
    %v281 = vsub.f32 %v265, %v72
    %v282 = vsub.f32 %v266, %v72
    %v283 = vsub.f32 %v265, %v77
    %v284 = vsub.f32 %v266, %v77
    %v285 = vmul.f32 %v269, %v269
    %v286 = vmul.f32 %v270, %v270
    %v287 = vmul.f32 %v271, %v271
    %v288 = vmul.f32 %v272, %v272
    %v289 = vmul.f32 %v273, %v273
    %v290 = vmul.f32 %v274, %v274
    %v291 = vmul.f32 %v275, %v275
    %v292 = vmul.f32 %v276, %v276
    %v293 = vmul.f32 %v277, %v277
    %v294 = vmul.f32 %v278, %v278
    %v295 = vmul.f32 %v279, %v279
    %v296 = vmul.f32 %v280, %v280
    %v297 = vmul.f32 %v281, %v281
    %v298 = vmul.f32 %v282, %v282
    %v299 = vmul.f32 %v283, %v283
    %v300 = vmul.f32 %v284, %v284
    %v301 = vmul.f32 %v285, -72.13475
    %v302 = vmul.f32 %v286, -72.13475
    %v303 = vmul.f32 %v287, -72.13475
    %v304 = vmul.f32 %v288, -72.13475
    %v305 = vmul.f32 %v289, -72.13475
    %v306 = vmul.f32 %v290, -72.13475
    %v307 = vmul.f32 %v291, -72.13475
    %v308 = vmul.f32 %v292, -72.13475
    %v309 = vmul.f32 %v293, -72.13475
    %v310 = vmul.f32 %v294, -72.13475
    %v311 = vmul.f32 %v295, -72.13475
    %v312 = vmul.f32 %v296, -72.13475
    %v313 = vmul.f32 %v297, -72.13475
    %v314 = vmul.f32 %v298, -72.13475
    %v315 = vmul.f32 %v299, -72.13475
    %v316 = vmul.f32 %v300, -72.13475
    %v317 = vpow.pop %v301
    %v318 = vpow.pop %v302
    %v319 = vpow.pop %v303
    %v320 = vpow.pop %v304
    %v321 = vpow.pop %v305
    %v322 = vpow.pop %v306
    %v323 = vpow.pop %v307
    %v324 = vpow.pop %v308
    %v325 = vpow.pop %v309
    %v326 = vpow.pop %v310
    %v327 = vpow.pop %v311
    %v328 = vpow.pop %v312
    %v329 = vpow.pop %v313
    %v330 = vpow.pop %v314
    %v331 = vpow.pop %v315
    %v332 = vpow.pop %v316
    %v333 = vadd.f32 %v238, %v317
    %v334 = vadd.f32 %v239, %v318
    %v335 = vadd.f32 %v240, %v319
    %v336 = vadd.f32 %v241, %v320
    %v337 = vadd.f32 %v242, %v321
    %v338 = vadd.f32 %v243, %v322
    %v339 = vadd.f32 %v244, %v323
    %v340 = vadd.f32 %v245, %v324
    %v341 = vadd.f32 %v246, %v325
    %v342 = vadd.f32 %v247, %v326
    %v343 = vadd.f32 %v248, %v327
    %v344 = vadd.f32 %v249, %v328
    %v345 = vadd.f32 %v250, %v329
    %v346 = vadd.f32 %v251, %v330
    %v347 = vadd.f32 %v252, %v331
    %v348 = vadd.f32 %v253, %v332
    %s349 = sadd.s32 0, 3
    %s350 = sshra.s32 %s349, 2
    %s351 = sand.u32 %s349, 3
    %s352 = sshra.s32 %s349, 2
    %s353 = sand.u32 %s349, 3
    %s354 = smul.u32 %s350, 2
    %s355 = smul.u32 %s354, 4
    %s356 = sadd.s32 %s355, %s353
    %s357 = scalar_lea.vmem %s0, %s356
    %v358 = vld [vmem:[%s357] ss:$4 sm:$0x3]
    %v360 = vperm.slane %v358, 0
    %v361 = vperm.slane %v358, 1
    %v364 = vsub.f32 %v360, %v42
    %v365 = vsub.f32 %v361, %v42
    %v366 = vsub.f32 %v360, %v47
    %v367 = vsub.f32 %v361, %v47
    %v368 = vsub.f32 %v360, %v52
    %v369 = vsub.f32 %v361, %v52
    %v370 = vsub.f32 %v360, %v57
    %v371 = vsub.f32 %v361, %v57
    %v372 = vsub.f32 %v360, %v62
    %v373 = vsub.f32 %v361, %v62
    %v374 = vsub.f32 %v360, %v67
    %v375 = vsub.f32 %v361, %v67
    %v376 = vsub.f32 %v360, %v72
    %v377 = vsub.f32 %v361, %v72
    %v378 = vsub.f32 %v360, %v77
    %v379 = vsub.f32 %v361, %v77
    %v380 = vmul.f32 %v364, %v364
    %v381 = vmul.f32 %v365, %v365
    %v382 = vmul.f32 %v366, %v366
    %v383 = vmul.f32 %v367, %v367
    %v384 = vmul.f32 %v368, %v368
    %v385 = vmul.f32 %v369, %v369
    %v386 = vmul.f32 %v370, %v370
    %v387 = vmul.f32 %v371, %v371
    %v388 = vmul.f32 %v372, %v372
    %v389 = vmul.f32 %v373, %v373
    %v390 = vmul.f32 %v374, %v374
    %v391 = vmul.f32 %v375, %v375
    %v392 = vmul.f32 %v376, %v376
    %v393 = vmul.f32 %v377, %v377
    %v394 = vmul.f32 %v378, %v378
    %v395 = vmul.f32 %v379, %v379
    %v396 = vmul.f32 %v380, -72.13475
    %v397 = vmul.f32 %v381, -72.13475
    %v398 = vmul.f32 %v382, -72.13475
    %v399 = vmul.f32 %v383, -72.13475
    %v400 = vmul.f32 %v384, -72.13475
    %v401 = vmul.f32 %v385, -72.13475
    %v402 = vmul.f32 %v386, -72.13475
    %v403 = vmul.f32 %v387, -72.13475
    %v404 = vmul.f32 %v388, -72.13475
    %v405 = vmul.f32 %v389, -72.13475
    %v406 = vmul.f32 %v390, -72.13475
    %v407 = vmul.f32 %v391, -72.13475
    %v408 = vmul.f32 %v392, -72.13475
    %v409 = vmul.f32 %v393, -72.13475
    %v410 = vmul.f32 %v394, -72.13475
    %v411 = vmul.f32 %v395, -72.13475
    %v412 = vpow.pop %v396
    %v413 = vpow.pop %v397
    %v414 = vpow.pop %v398
    %v415 = vpow.pop %v399
    %v416 = vpow.pop %v400
    %v417 = vpow.pop %v401
    %v418 = vpow.pop %v402
    %v419 = vpow.pop %v403
    %v420 = vpow.pop %v404
    %v421 = vpow.pop %v405
    %v422 = vpow.pop %v406
    %v423 = vpow.pop %v407
    %v424 = vpow.pop %v408
    %v425 = vpow.pop %v409
    %v426 = vpow.pop %v410
    %v427 = vpow.pop %v411
    %v428 = vadd.f32 %v333, %v412
    %v429 = vadd.f32 %v334, %v413
    %v430 = vadd.f32 %v335, %v414
    %v431 = vadd.f32 %v336, %v415
    %v432 = vadd.f32 %v337, %v416
    %v433 = vadd.f32 %v338, %v417
    %v434 = vadd.f32 %v339, %v418
    %v435 = vadd.f32 %v340, %v419
    %v436 = vadd.f32 %v341, %v420
    %v437 = vadd.f32 %v342, %v421
    %v438 = vadd.f32 %v343, %v422
    %v439 = vadd.f32 %v344, %v423
    %v440 = vadd.f32 %v345, %v424
    %v441 = vadd.f32 %v346, %v425
    %v442 = vadd.f32 %v347, %v426
    %v443 = vadd.f32 %v348, %v427
    %v444 = vld [vmem:[#allocation2] sm:$0xff]
    %v445 = vld [vmem:[#allocation2 + $0x8] sm:$0xff]
    %v446 = vld [vmem:[#allocation2 + $0x10] sm:$0xff]
    %v447 = vld [vmem:[#allocation2 + $0x18] sm:$0xff]
    %v448 = vld [vmem:[#allocation2 + $0x20] sm:$0xff]
    %v449 = vld [vmem:[#allocation2 + $0x28] sm:$0xff]
    %v450 = vld [vmem:[#allocation2 + $0x30] sm:$0xff]
    %v451 = vld [vmem:[#allocation2 + $0x38] sm:$0xff]
    %v452 = vld [vmem:[#allocation2 + $0x40] sm:$0xff]
    %v453 = vld [vmem:[#allocation2 + $0x48] sm:$0xff]
    %v454 = vld [vmem:[#allocation2 + $0x50] sm:$0xff]
    %v455 = vld [vmem:[#allocation2 + $0x58] sm:$0xff]
    %v456 = vld [vmem:[#allocation2 + $0x60] sm:$0xff]
    %v457 = vld [vmem:[#allocation2 + $0x68] sm:$0xff]
    %v458 = vld [vmem:[#allocation2 + $0x70] sm:$0xff]
    %v459 = vld [vmem:[#allocation2 + $0x78] sm:$0xff]
    %v460 = vadd.f32 %v444, %v428
    %v461 = vadd.f32 %v445, %v429
    %v462 = vadd.f32 %v446, %v430
    %v463 = vadd.f32 %v447, %v431
    %v464 = vadd.f32 %v448, %v432
    %v465 = vadd.f32 %v449, %v433
    %v466 = vadd.f32 %v450, %v434
    %v467 = vadd.f32 %v451, %v435
    %v468 = vadd.f32 %v452, %v436
    %v469 = vadd.f32 %v453, %v437
    %v470 = vadd.f32 %v454, %v438
    %v471 = vadd.f32 %v455, %v439
    %v472 = vadd.f32 %v456, %v440
    %v473 = vadd.f32 %v457, %v441
    %v474 = vadd.f32 %v458, %v442
    %v475 = vadd.f32 %v459, %v443
    %476 = vst [vmem:[#allocation2] sm:$0xff] %v460
    %477 = vst [vmem:[#allocation2 + $0x8] sm:$0xff] %v461
    %478 = vst [vmem:[#allocation2 + $0x10] sm:$0xff] %v462
    %479 = vst [vmem:[#allocation2 + $0x18] sm:$0xff] %v463
    %480 = vst [vmem:[#allocation2 + $0x20] sm:$0xff] %v464
    %481 = vst [vmem:[#allocation2 + $0x28] sm:$0xff] %v465
    %482 = vst [vmem:[#allocation2 + $0x30] sm:$0xff] %v466
    %483 = vst [vmem:[#allocation2 + $0x38] sm:$0xff] %v467
    %484 = vst [vmem:[#allocation2 + $0x40] sm:$0xff] %v468
    %485 = vst [vmem:[#allocation2 + $0x48] sm:$0xff] %v469
    %486 = vst [vmem:[#allocation2 + $0x50] sm:$0xff] %v470
    %487 = vst [vmem:[#allocation2 + $0x58] sm:$0xff] %v471
    %488 = vst [vmem:[#allocation2 + $0x60] sm:$0xff] %v472
    %489 = vst [vmem:[#allocation2 + $0x68] sm:$0xff] %v473
    %490 = vst [vmem:[#allocation2 + $0x70] sm:$0xff] %v474
    %491 = vst [vmem:[#allocation2 + $0x78] sm:$0xff] %v475
  $region17: #{tpu_custom_call.1} parent=0 // pred_fallthru
    _
  %p492 = scmp.lt.s32.totalorder %s80, 1024
  %p493 = scmp.gt.s32.totalorder %s81, 1024
  %p494 = pnand %p492, %p493
  %p495 = pneg %p494
  // Predicated region
  $region18: #{tpu_custom_call.1} parent=0 // pred_check
    _
  $region19: #{tpu_custom_call.1} parent=0 // pred_check_branch
    %497 = sbr.rel (%p494) target = $region21
  $region20: #{tpu_custom_call.1} parent=0 // pred_region
    %v498 = vlaneseq
    %v499 = vand.u32 %v498, 127
    %v500 = vadd.s32 %v499, 128
    %s501 = smul.u32 0, 2
    %s502 = smul.addr %s501, 4
    %s503 = scalar_lea.vmem %s0, %s502
    %v504 = vld [vmem:[%s503] ss:$4 sm:$0x3]
    %v506 = vperm.slane %v504, 0
    %v507 = vperm.slane %v504, 1
    %v510 = vsub.f32 %v506, %v42
    %v511 = vsub.f32 %v507, %v42
    %v512 = vsub.f32 %v506, %v47
    %v513 = vsub.f32 %v507, %v47
    %v514 = vsub.f32 %v506, %v52
    %v515 = vsub.f32 %v507, %v52
    %v516 = vsub.f32 %v506, %v57
    %v517 = vsub.f32 %v507, %v57
    %v518 = vsub.f32 %v506, %v62
    %v519 = vsub.f32 %v507, %v62
    %v520 = vsub.f32 %v506, %v67
    %v521 = vsub.f32 %v507, %v67
    %v522 = vsub.f32 %v506, %v72
    %v523 = vsub.f32 %v507, %v72
    %v524 = vsub.f32 %v506, %v77
    %v525 = vsub.f32 %v507, %v77
    %v526 = vmul.f32 %v510, %v510
    %v527 = vmul.f32 %v511, %v511
    %v528 = vmul.f32 %v512, %v512
    %v529 = vmul.f32 %v513, %v513
    %v530 = vmul.f32 %v514, %v514
    %v531 = vmul.f32 %v515, %v515
    %v532 = vmul.f32 %v516, %v516
    %v533 = vmul.f32 %v517, %v517
    %v534 = vmul.f32 %v518, %v518
    %v535 = vmul.f32 %v519, %v519
    %v536 = vmul.f32 %v520, %v520
    %v537 = vmul.f32 %v521, %v521
    %v538 = vmul.f32 %v522, %v522
    %v539 = vmul.f32 %v523, %v523
    %v540 = vmul.f32 %v524, %v524
    %v541 = vmul.f32 %v525, %v525
    %v542 = vmul.f32 %v526, -72.13475
    %v543 = vmul.f32 %v527, -72.13475
    %v544 = vmul.f32 %v528, -72.13475
    %v545 = vmul.f32 %v529, -72.13475
    %v546 = vmul.f32 %v530, -72.13475
    %v547 = vmul.f32 %v531, -72.13475
    %v548 = vmul.f32 %v532, -72.13475
    %v549 = vmul.f32 %v533, -72.13475
    %v550 = vmul.f32 %v534, -72.13475
    %v551 = vmul.f32 %v535, -72.13475
    %v552 = vmul.f32 %v536, -72.13475
    %v553 = vmul.f32 %v537, -72.13475
    %v554 = vmul.f32 %v538, -72.13475
    %v555 = vmul.f32 %v539, -72.13475
    %v556 = vmul.f32 %v540, -72.13475
    %v557 = vmul.f32 %v541, -72.13475
    %v558 = vpow.pop %v542
    %v559 = vpow.pop %v543
    %v560 = vpow.pop %v544
    %v561 = vpow.pop %v545
    %v562 = vpow.pop %v546
    %v563 = vpow.pop %v547
    %v564 = vpow.pop %v548
    %v565 = vpow.pop %v549
    %v566 = vpow.pop %v550
    %v567 = vpow.pop %v551
    %v568 = vpow.pop %v552
    %v569 = vpow.pop %v553
    %v570 = vpow.pop %v554
    %v571 = vpow.pop %v555
    %v572 = vpow.pop %v556
    %v573 = vpow.pop %v557
    %s574 = smul.u32 0, 256
    %s575 = sadd.s32 %s80, %s574
    %s576 = ssub.s32 1024, %s575
    %v577 = vstv %s576
    %vm578 = vcmp.lt.s32.totalorder %v499, %v577
    %vm579 = vcmp.lt.s32.totalorder %v500, %v577
    %v580 = vsel %vm578, 1, 0
    %v581 = vsel %vm579, 1, 0
    %vm582 = vcmp.eq.s32.totalorder %v580, 1
    %vm583 = vcmp.eq.s32.totalorder %v581, 1
    %v584 = vsel %vm582, %v558, 0.0
    %v585 = vsel %vm583, %v559, 0.0
    %v586 = vsel %vm582, %v560, 0.0
    %v587 = vsel %vm583, %v561, 0.0
    %v588 = vsel %vm582, %v562, 0.0
    %v589 = vsel %vm583, %v563, 0.0
    %v590 = vsel %vm582, %v564, 0.0
    %v591 = vsel %vm583, %v565, 0.0
    %v592 = vsel %vm582, %v566, 0.0
    %v593 = vsel %vm583, %v567, 0.0
    %v594 = vsel %vm582, %v568, 0.0
    %v595 = vsel %vm583, %v569, 0.0
    %v596 = vsel %vm582, %v570, 0.0
    %v597 = vsel %vm583, %v571, 0.0
    %v598 = vsel %vm582, %v572, 0.0
    %v599 = vsel %vm583, %v573, 0.0
    %s600 = sadd.s32 0, 1
    %s601 = sshra.s32 %s600, 2
    %s602 = sand.u32 %s600, 3
    %s603 = sshra.s32 %s600, 2
    %s604 = sand.u32 %s600, 3
    %s605 = smul.u32 %s601, 2
    %s606 = smul.u32 %s605, 4
    %s607 = sadd.s32 %s606, %s604
    %s608 = scalar_lea.vmem %s0, %s607
    %v609 = vld [vmem:[%s608] ss:$4 sm:$0x3]
    %v611 = vperm.slane %v609, 0
    %v612 = vperm.slane %v609, 1
    %v615 = vsub.f32 %v611, %v42
    %v616 = vsub.f32 %v612, %v42
    %v617 = vsub.f32 %v611, %v47
    %v618 = vsub.f32 %v612, %v47
    %v619 = vsub.f32 %v611, %v52
    %v620 = vsub.f32 %v612, %v52
    %v621 = vsub.f32 %v611, %v57
    %v622 = vsub.f32 %v612, %v57
    %v623 = vsub.f32 %v611, %v62
    %v624 = vsub.f32 %v612, %v62
    %v625 = vsub.f32 %v611, %v67
    %v626 = vsub.f32 %v612, %v67
    %v627 = vsub.f32 %v611, %v72
    %v628 = vsub.f32 %v612, %v72
    %v629 = vsub.f32 %v611, %v77
    %v630 = vsub.f32 %v612, %v77
    %v631 = vmul.f32 %v615, %v615
    %v632 = vmul.f32 %v616, %v616
    %v633 = vmul.f32 %v617, %v617
    %v634 = vmul.f32 %v618, %v618
    %v635 = vmul.f32 %v619, %v619
    %v636 = vmul.f32 %v620, %v620
    %v637 = vmul.f32 %v621, %v621
    %v638 = vmul.f32 %v622, %v622
    %v639 = vmul.f32 %v623, %v623
    %v640 = vmul.f32 %v624, %v624
    %v641 = vmul.f32 %v625, %v625
    %v642 = vmul.f32 %v626, %v626
    %v643 = vmul.f32 %v627, %v627
    %v644 = vmul.f32 %v628, %v628
    %v645 = vmul.f32 %v629, %v629
    %v646 = vmul.f32 %v630, %v630
    %v647 = vmul.f32 %v631, -72.13475
    %v648 = vmul.f32 %v632, -72.13475
    %v649 = vmul.f32 %v633, -72.13475
    %v650 = vmul.f32 %v634, -72.13475
    %v651 = vmul.f32 %v635, -72.13475
    %v652 = vmul.f32 %v636, -72.13475
    %v653 = vmul.f32 %v637, -72.13475
    %v654 = vmul.f32 %v638, -72.13475
    %v655 = vmul.f32 %v639, -72.13475
    %v656 = vmul.f32 %v640, -72.13475
    %v657 = vmul.f32 %v641, -72.13475
    %v658 = vmul.f32 %v642, -72.13475
    %v659 = vmul.f32 %v643, -72.13475
    %v660 = vmul.f32 %v644, -72.13475
    %v661 = vmul.f32 %v645, -72.13475
    %v662 = vmul.f32 %v646, -72.13475
    %v663 = vpow.pop %v647
    %v664 = vpow.pop %v648
    %v665 = vpow.pop %v649
    %v666 = vpow.pop %v650
    %v667 = vpow.pop %v651
    %v668 = vpow.pop %v652
    %v669 = vpow.pop %v653
    %v670 = vpow.pop %v654
    %v671 = vpow.pop %v655
    %v672 = vpow.pop %v656
    %v673 = vpow.pop %v657
    %v674 = vpow.pop %v658
    %v675 = vpow.pop %v659
    %v676 = vpow.pop %v660
    %v677 = vpow.pop %v661
    %v678 = vpow.pop %v662
    %s679 = smul.u32 %s600, 256
    %s680 = sadd.s32 %s80, %s679
    %s681 = ssub.s32 1024, %s680
    %v682 = vstv %s681
    %vm683 = vcmp.lt.s32.totalorder %v499, %v682
    %vm684 = vcmp.lt.s32.totalorder %v500, %v682
    %v685 = vsel %vm683, 1, 0
    %v686 = vsel %vm684, 1, 0
    %vm687 = vcmp.eq.s32.totalorder %v685, 1
    %vm688 = vcmp.eq.s32.totalorder %v686, 1
    %v689 = vsel %vm687, %v663, 0.0
    %v690 = vsel %vm688, %v664, 0.0
    %v691 = vsel %vm687, %v665, 0.0
    %v692 = vsel %vm688, %v666, 0.0
    %v693 = vsel %vm687, %v667, 0.0
    %v694 = vsel %vm688, %v668, 0.0
    %v695 = vsel %vm687, %v669, 0.0
    %v696 = vsel %vm688, %v670, 0.0
    %v697 = vsel %vm687, %v671, 0.0
    %v698 = vsel %vm688, %v672, 0.0
    %v699 = vsel %vm687, %v673, 0.0
    %v700 = vsel %vm688, %v674, 0.0
    %v701 = vsel %vm687, %v675, 0.0
    %v702 = vsel %vm688, %v676, 0.0
    %v703 = vsel %vm687, %v677, 0.0
    %v704 = vsel %vm688, %v678, 0.0
    %v705 = vadd.f32 %v584, %v689
    %v706 = vadd.f32 %v585, %v690
    %v707 = vadd.f32 %v586, %v691
    %v708 = vadd.f32 %v587, %v692
    %v709 = vadd.f32 %v588, %v693
    %v710 = vadd.f32 %v589, %v694
    %v711 = vadd.f32 %v590, %v695
    %v712 = vadd.f32 %v591, %v696
    %v713 = vadd.f32 %v592, %v697
    %v714 = vadd.f32 %v593, %v698
    %v715 = vadd.f32 %v594, %v699
    %v716 = vadd.f32 %v595, %v700
    %v717 = vadd.f32 %v596, %v701
    %v718 = vadd.f32 %v597, %v702
    %v719 = vadd.f32 %v598, %v703
    %v720 = vadd.f32 %v599, %v704
    %s721 = sadd.s32 0, 2
    %s722 = sshra.s32 %s721, 2
    %s723 = sand.u32 %s721, 3
    %s724 = sshra.s32 %s721, 2
    %s725 = sand.u32 %s721, 3
    %s726 = smul.u32 %s722, 2
    %s727 = smul.u32 %s726, 4
    %s728 = sadd.s32 %s727, %s725
    %s729 = scalar_lea.vmem %s0, %s728
    %v730 = vld [vmem:[%s729] ss:$4 sm:$0x3]
    %v732 = vperm.slane %v730, 0
    %v733 = vperm.slane %v730, 1
    %v736 = vsub.f32 %v732, %v42
    %v737 = vsub.f32 %v733, %v42
    %v738 = vsub.f32 %v732, %v47
    %v739 = vsub.f32 %v733, %v47
    %v740 = vsub.f32 %v732, %v52
    %v741 = vsub.f32 %v733, %v52
    %v742 = vsub.f32 %v732, %v57
    %v743 = vsub.f32 %v733, %v57
    %v744 = vsub.f32 %v732, %v62
    %v745 = vsub.f32 %v733, %v62
    %v746 = vsub.f32 %v732, %v67
    %v747 = vsub.f32 %v733, %v67
    %v748 = vsub.f32 %v732, %v72
    %v749 = vsub.f32 %v733, %v72
    %v750 = vsub.f32 %v732, %v77
    %v751 = vsub.f32 %v733, %v77
    %v752 = vmul.f32 %v736, %v736
    %v753 = vmul.f32 %v737, %v737
    %v754 = vmul.f32 %v738, %v738
    %v755 = vmul.f32 %v739, %v739
    %v756 = vmul.f32 %v740, %v740
    %v757 = vmul.f32 %v741, %v741
    %v758 = vmul.f32 %v742, %v742
    %v759 = vmul.f32 %v743, %v743
    %v760 = vmul.f32 %v744, %v744
    %v761 = vmul.f32 %v745, %v745
    %v762 = vmul.f32 %v746, %v746
    %v763 = vmul.f32 %v747, %v747
    %v764 = vmul.f32 %v748, %v748
    %v765 = vmul.f32 %v749, %v749
    %v766 = vmul.f32 %v750, %v750
    %v767 = vmul.f32 %v751, %v751
    %v768 = vmul.f32 %v752, -72.13475
    %v769 = vmul.f32 %v753, -72.13475
    %v770 = vmul.f32 %v754, -72.13475
    %v771 = vmul.f32 %v755, -72.13475
    %v772 = vmul.f32 %v756, -72.13475
    %v773 = vmul.f32 %v757, -72.13475
    %v774 = vmul.f32 %v758, -72.13475
    %v775 = vmul.f32 %v759, -72.13475
    %v776 = vmul.f32 %v760, -72.13475
    %v777 = vmul.f32 %v761, -72.13475
    %v778 = vmul.f32 %v762, -72.13475
    %v779 = vmul.f32 %v763, -72.13475
    %v780 = vmul.f32 %v764, -72.13475
    %v781 = vmul.f32 %v765, -72.13475
    %v782 = vmul.f32 %v766, -72.13475
    %v783 = vmul.f32 %v767, -72.13475
    %v784 = vpow.pop %v768
    %v785 = vpow.pop %v769
    %v786 = vpow.pop %v770
    %v787 = vpow.pop %v771
    %v788 = vpow.pop %v772
    %v789 = vpow.pop %v773
    %v790 = vpow.pop %v774
    %v791 = vpow.pop %v775
    %v792 = vpow.pop %v776
    %v793 = vpow.pop %v777
    %v794 = vpow.pop %v778
    %v795 = vpow.pop %v779
    %v796 = vpow.pop %v780
    %v797 = vpow.pop %v781
    %v798 = vpow.pop %v782
    %v799 = vpow.pop %v783
    %s800 = smul.u32 %s721, 256
    %s801 = sadd.s32 %s80, %s800
    %s802 = ssub.s32 1024, %s801
    %v803 = vstv %s802
    %vm804 = vcmp.lt.s32.totalorder %v499, %v803
    %vm805 = vcmp.lt.s32.totalorder %v500, %v803
    %v806 = vsel %vm804, 1, 0
    %v807 = vsel %vm805, 1, 0
    %vm808 = vcmp.eq.s32.totalorder %v806, 1
    %vm809 = vcmp.eq.s32.totalorder %v807, 1
    %v810 = vsel %vm808, %v784, 0.0
    %v811 = vsel %vm809, %v785, 0.0
    %v812 = vsel %vm808, %v786, 0.0
    %v813 = vsel %vm809, %v787, 0.0
    %v814 = vsel %vm808, %v788, 0.0
    %v815 = vsel %vm809, %v789, 0.0
    %v816 = vsel %vm808, %v790, 0.0
    %v817 = vsel %vm809, %v791, 0.0
    %v818 = vsel %vm808, %v792, 0.0
    %v819 = vsel %vm809, %v793, 0.0
    %v820 = vsel %vm808, %v794, 0.0
    %v821 = vsel %vm809, %v795, 0.0
    %v822 = vsel %vm808, %v796, 0.0
    %v823 = vsel %vm809, %v797, 0.0
    %v824 = vsel %vm808, %v798, 0.0
    %v825 = vsel %vm809, %v799, 0.0
    %v826 = vadd.f32 %v705, %v810
    %v827 = vadd.f32 %v706, %v811
    %v828 = vadd.f32 %v707, %v812
    %v829 = vadd.f32 %v708, %v813
    %v830 = vadd.f32 %v709, %v814
    %v831 = vadd.f32 %v710, %v815
    %v832 = vadd.f32 %v711, %v816
    %v833 = vadd.f32 %v712, %v817
    %v834 = vadd.f32 %v713, %v818
    %v835 = vadd.f32 %v714, %v819
    %v836 = vadd.f32 %v715, %v820
    %v837 = vadd.f32 %v716, %v821
    %v838 = vadd.f32 %v717, %v822
    %v839 = vadd.f32 %v718, %v823
    %v840 = vadd.f32 %v719, %v824
    %v841 = vadd.f32 %v720, %v825
    %s842 = sadd.s32 0, 3
    %s843 = sshra.s32 %s842, 2
    %s844 = sand.u32 %s842, 3
    %s845 = sshra.s32 %s842, 2
    %s846 = sand.u32 %s842, 3
    %s847 = smul.u32 %s843, 2
    %s848 = smul.u32 %s847, 4
    %s849 = sadd.s32 %s848, %s846
    %s850 = scalar_lea.vmem %s0, %s849
    %v851 = vld [vmem:[%s850] ss:$4 sm:$0x3]
    %v853 = vperm.slane %v851, 0
    %v854 = vperm.slane %v851, 1
    %v857 = vsub.f32 %v853, %v42
    %v858 = vsub.f32 %v854, %v42
    %v859 = vsub.f32 %v853, %v47
    %v860 = vsub.f32 %v854, %v47
    %v861 = vsub.f32 %v853, %v52
    %v862 = vsub.f32 %v854, %v52
    %v863 = vsub.f32 %v853, %v57
    %v864 = vsub.f32 %v854, %v57
    %v865 = vsub.f32 %v853, %v62
    %v866 = vsub.f32 %v854, %v62
    %v867 = vsub.f32 %v853, %v67
    %v868 = vsub.f32 %v854, %v67
    %v869 = vsub.f32 %v853, %v72
    %v870 = vsub.f32 %v854, %v72
    %v871 = vsub.f32 %v853, %v77
    %v872 = vsub.f32 %v854, %v77
    %v873 = vmul.f32 %v857, %v857
    %v874 = vmul.f32 %v858, %v858
    %v875 = vmul.f32 %v859, %v859
    %v876 = vmul.f32 %v860, %v860
    %v877 = vmul.f32 %v861, %v861
    %v878 = vmul.f32 %v862, %v862
    %v879 = vmul.f32 %v863, %v863
    %v880 = vmul.f32 %v864, %v864
    %v881 = vmul.f32 %v865, %v865
    %v882 = vmul.f32 %v866, %v866
    %v883 = vmul.f32 %v867, %v867
    %v884 = vmul.f32 %v868, %v868
    %v885 = vmul.f32 %v869, %v869
    %v886 = vmul.f32 %v870, %v870
    %v887 = vmul.f32 %v871, %v871
    %v888 = vmul.f32 %v872, %v872
    %v889 = vmul.f32 %v873, -72.13475
    %v890 = vmul.f32 %v874, -72.13475
    %v891 = vmul.f32 %v875, -72.13475
    %v892 = vmul.f32 %v876, -72.13475
    %v893 = vmul.f32 %v877, -72.13475
    %v894 = vmul.f32 %v878, -72.13475
    %v895 = vmul.f32 %v879, -72.13475
    %v896 = vmul.f32 %v880, -72.13475
    %v897 = vmul.f32 %v881, -72.13475
    %v898 = vmul.f32 %v882, -72.13475
    %v899 = vmul.f32 %v883, -72.13475
    %v900 = vmul.f32 %v884, -72.13475
    %v901 = vmul.f32 %v885, -72.13475
    %v902 = vmul.f32 %v886, -72.13475
    %v903 = vmul.f32 %v887, -72.13475
    %v904 = vmul.f32 %v888, -72.13475
    %v905 = vpow.pop %v889
    %v906 = vpow.pop %v890
    %v907 = vpow.pop %v891
    %v908 = vpow.pop %v892
    %v909 = vpow.pop %v893
    %v910 = vpow.pop %v894
    %v911 = vpow.pop %v895
    %v912 = vpow.pop %v896
    %v913 = vpow.pop %v897
    %v914 = vpow.pop %v898
    %v915 = vpow.pop %v899
    %v916 = vpow.pop %v900
    %v917 = vpow.pop %v901
    %v918 = vpow.pop %v902
    %v919 = vpow.pop %v903
    %v920 = vpow.pop %v904
    %s921 = smul.u32 %s842, 256
    %s922 = sadd.s32 %s80, %s921
    %s923 = ssub.s32 1024, %s922
    %v924 = vstv %s923
    %vm925 = vcmp.lt.s32.totalorder %v499, %v924
    %vm926 = vcmp.lt.s32.totalorder %v500, %v924
    %v927 = vsel %vm925, 1, 0
    %v928 = vsel %vm926, 1, 0
    %vm929 = vcmp.eq.s32.totalorder %v927, 1
    %vm930 = vcmp.eq.s32.totalorder %v928, 1
    %v931 = vsel %vm929, %v905, 0.0
    %v932 = vsel %vm930, %v906, 0.0
    %v933 = vsel %vm929, %v907, 0.0
    %v934 = vsel %vm930, %v908, 0.0
    %v935 = vsel %vm929, %v909, 0.0
    %v936 = vsel %vm930, %v910, 0.0
    %v937 = vsel %vm929, %v911, 0.0
    %v938 = vsel %vm930, %v912, 0.0
    %v939 = vsel %vm929, %v913, 0.0
    %v940 = vsel %vm930, %v914, 0.0
    %v941 = vsel %vm929, %v915, 0.0
    %v942 = vsel %vm930, %v916, 0.0
    %v943 = vsel %vm929, %v917, 0.0
    %v944 = vsel %vm930, %v918, 0.0
    %v945 = vsel %vm929, %v919, 0.0
    %v946 = vsel %vm930, %v920, 0.0
    %v947 = vadd.f32 %v826, %v931
    %v948 = vadd.f32 %v827, %v932
    %v949 = vadd.f32 %v828, %v933
    %v950 = vadd.f32 %v829, %v934
    %v951 = vadd.f32 %v830, %v935
    %v952 = vadd.f32 %v831, %v936
    %v953 = vadd.f32 %v832, %v937
    %v954 = vadd.f32 %v833, %v938
    %v955 = vadd.f32 %v834, %v939
    %v956 = vadd.f32 %v835, %v940
    %v957 = vadd.f32 %v836, %v941
    %v958 = vadd.f32 %v837, %v942
    %v959 = vadd.f32 %v838, %v943
    %v960 = vadd.f32 %v839, %v944
    %v961 = vadd.f32 %v840, %v945
    %v962 = vadd.f32 %v841, %v946
    %v963 = vld [vmem:[#allocation2] sm:$0xff]
    %v964 = vld [vmem:[#allocation2 + $0x8] sm:$0xff]
    %v965 = vld [vmem:[#allocation2 + $0x10] sm:$0xff]
    %v966 = vld [vmem:[#allocation2 + $0x18] sm:$0xff]
    %v967 = vld [vmem:[#allocation2 + $0x20] sm:$0xff]
    %v968 = vld [vmem:[#allocation2 + $0x28] sm:$0xff]
    %v969 = vld [vmem:[#allocation2 + $0x30] sm:$0xff]
    %v970 = vld [vmem:[#allocation2 + $0x38] sm:$0xff]
    %v971 = vld [vmem:[#allocation2 + $0x40] sm:$0xff]
    %v972 = vld [vmem:[#allocation2 + $0x48] sm:$0xff]
    %v973 = vld [vmem:[#allocation2 + $0x50] sm:$0xff]
    %v974 = vld [vmem:[#allocation2 + $0x58] sm:$0xff]
    %v975 = vld [vmem:[#allocation2 + $0x60] sm:$0xff]
    %v976 = vld [vmem:[#allocation2 + $0x68] sm:$0xff]
    %v977 = vld [vmem:[#allocation2 + $0x70] sm:$0xff]
    %v978 = vld [vmem:[#allocation2 + $0x78] sm:$0xff]
    %v979 = vadd.f32 %v963, %v947
    %v980 = vadd.f32 %v964, %v948
    %v981 = vadd.f32 %v965, %v949
    %v982 = vadd.f32 %v966, %v950
    %v983 = vadd.f32 %v967, %v951
    %v984 = vadd.f32 %v968, %v952
    %v985 = vadd.f32 %v969, %v953
    %v986 = vadd.f32 %v970, %v954
    %v987 = vadd.f32 %v971, %v955
    %v988 = vadd.f32 %v972, %v956
    %v989 = vadd.f32 %v973, %v957
    %v990 = vadd.f32 %v974, %v958
    %v991 = vadd.f32 %v975, %v959
    %v992 = vadd.f32 %v976, %v960
    %v993 = vadd.f32 %v977, %v961
    %v994 = vadd.f32 %v978, %v962
    %995 = vst [vmem:[#allocation2] sm:$0xff] %v979
    %996 = vst [vmem:[#allocation2 + $0x8] sm:$0xff] %v980
    %997 = vst [vmem:[#allocation2 + $0x10] sm:$0xff] %v981
    %998 = vst [vmem:[#allocation2 + $0x18] sm:$0xff] %v982
    %999 = vst [vmem:[#allocation2 + $0x20] sm:$0xff] %v983
    %1000 = vst [vmem:[#allocation2 + $0x28] sm:$0xff] %v984
    %1001 = vst [vmem:[#allocation2 + $0x30] sm:$0xff] %v985
    %1002 = vst [vmem:[#allocation2 + $0x38] sm:$0xff] %v986
    %1003 = vst [vmem:[#allocation2 + $0x40] sm:$0xff] %v987
    %1004 = vst [vmem:[#allocation2 + $0x48] sm:$0xff] %v988
    %1005 = vst [vmem:[#allocation2 + $0x50] sm:$0xff] %v989
    %1006 = vst [vmem:[#allocation2 + $0x58] sm:$0xff] %v990
    %1007 = vst [vmem:[#allocation2 + $0x60] sm:$0xff] %v991
    %1008 = vst [vmem:[#allocation2 + $0x68] sm:$0xff] %v992
    %1009 = vst [vmem:[#allocation2 + $0x70] sm:$0xff] %v993
    %1010 = vst [vmem:[#allocation2 + $0x78] sm:$0xff] %v994
  $region21: #{tpu_custom_call.1} parent=0 // pred_fallthru
    _
  // Predicated region
  $region22: #{tpu_custom_call.1} parent=0 // pred_check
    %p1011 = pneg %p11
  $region23: #{tpu_custom_call.1} parent=0 // pred_check_branch
    %1013 = sbr.rel (%p1011) target = $region25
  $region24: #{tpu_custom_call.1} parent=0 // pred_region
    %v1014 = vld [vmem:[#allocation2] sm:$0xff]
    %v1015 = vld [vmem:[#allocation2 + $0x8] sm:$0xff]
    %v1016 = vld [vmem:[#allocation2 + $0x10] sm:$0xff]
    %v1017 = vld [vmem:[#allocation2 + $0x18] sm:$0xff]
    %v1018 = vld [vmem:[#allocation2 + $0x20] sm:$0xff]
    %v1019 = vld [vmem:[#allocation2 + $0x28] sm:$0xff]
    %v1020 = vld [vmem:[#allocation2 + $0x30] sm:$0xff]
    %v1021 = vld [vmem:[#allocation2 + $0x38] sm:$0xff]
    %v1022 = vld [vmem:[#allocation2 + $0x40] sm:$0xff]
    %v1023 = vld [vmem:[#allocation2 + $0x48] sm:$0xff]
    %v1024 = vld [vmem:[#allocation2 + $0x50] sm:$0xff]
    %v1025 = vld [vmem:[#allocation2 + $0x58] sm:$0xff]
    %v1026 = vld [vmem:[#allocation2 + $0x60] sm:$0xff]
    %v1027 = vld [vmem:[#allocation2 + $0x68] sm:$0xff]
    %v1028 = vld [vmem:[#allocation2 + $0x70] sm:$0xff]
    %v1029 = vld [vmem:[#allocation2 + $0x78] sm:$0xff]
    %v1030 = vadd.f32 %v1014, %v1015
    %1031 = vadd.xlane.f32.xlu0 %v1030
    %v1032 = vpop.xlane.xlu0 %1031
    %v1033 = vadd.f32 %v1016, %v1017
    %1034 = vadd.xlane.f32.xlu0 %v1033
    %v1035 = vpop.xlane.xlu0 %1034
    %v1036 = vadd.f32 %v1018, %v1019
    %1037 = vadd.xlane.f32.xlu0 %v1036
    %v1038 = vpop.xlane.xlu0 %1037
    %v1039 = vadd.f32 %v1020, %v1021
    %1040 = vadd.xlane.f32.xlu0 %v1039
    %v1041 = vpop.xlane.xlu0 %1040
    %v1042 = vadd.f32 %v1022, %v1023
    %1043 = vadd.xlane.f32.xlu0 %v1042
    %v1044 = vpop.xlane.xlu0 %1043
    %v1045 = vadd.f32 %v1024, %v1025
    %1046 = vadd.xlane.f32.xlu0 %v1045
    %v1047 = vpop.xlane.xlu0 %1046
    %v1048 = vadd.f32 %v1026, %v1027
    %1049 = vadd.xlane.f32.xlu0 %v1048
    %v1050 = vpop.xlane.xlu0 %1049
    %v1051 = vadd.f32 %v1028, %v1029
    %1052 = vadd.xlane.f32.xlu0 %v1051
    %v1053 = vpop.xlane.xlu0 %1052
    %v1054 = vmul.f32 %v1032, 0.3740084
    %v1055 = vmul.f32 %v1035, 0.3740084
    %v1056 = vmul.f32 %v1038, 0.3740084
    %v1057 = vmul.f32 %v1041, 0.3740084
    %v1058 = vmul.f32 %v1044, 0.3740084
    %v1059 = vmul.f32 %v1047, 0.3740084
    %v1060 = vmul.f32 %v1050, 0.3740084
    %v1061 = vmul.f32 %v1053, 0.3740084
    %vm1062 = vcmask 7168
    %1063 = vst.msk [vmem:[%s2] sm:$0xff] %vm1062, %v1054
    %1064 = vst.msk [vmem:[%s2 + $0x8] sm:$0xff] %vm1062, %v1055
    %1065 = vst.msk [vmem:[%s2 + $0x10] sm:$0xff] %vm1062, %v1056
    %1066 = vst.msk [vmem:[%s2 + $0x18] sm:$0xff] %vm1062, %v1057
    %1067 = vst.msk [vmem:[%s2 + $0x20] sm:$0xff] %vm1062, %v1058
    %1068 = vst.msk [vmem:[%s2 + $0x28] sm:$0xff] %vm1062, %v1059
    %1069 = vst.msk [vmem:[%s2 + $0x30] sm:$0xff] %vm1062, %v1060
    %1070 = vst.msk [vmem:[%s2 + $0x38] sm:$0xff] %vm1062, %v1061
  $region25: #{tpu_custom_call.1} parent=0 // pred_fallthru
    _
  // Predicated region
  $region26: #{tpu_custom_call.1} parent=0 // pred_check
    _
  $region27: #{tpu_custom_call.1} parent=0 // pred_check_branch
    %1072 = sbr.rel (0) target = $region29
  $region28: #{tpu_custom_call.1} parent=0 // pred_region
    _
  $region29: #{tpu_custom_call.1} parent=0 // pred_fallthru
    _
  // Predicated region
  $region30: #{tpu_custom_call.1} parent=0 // pred_check
    _
  $region31: #{tpu_custom_call.1} parent=0 // pred_check_branch
    %1074 = sbr.rel (0) target = $region33
  $region32: #{tpu_custom_call.1} parent=0 // pred_region
    _
  $region33: #{tpu_custom_call.1} parent=0 // pred_fallthru
    _

// kernel: tpu_custom_call.1
$region0: #{tpu_custom_call.1}
  #allocation0 [shape = 'u32[]', space=smem, size = 0x4, offset = 0x4, fixed_abs, tag = 'smem constant byte address 0x4 - core index']
  #allocation1 [shape = 'u32[72,128]{1,0:T(1,128)}', space=vmem, size = 0x9000, scoped, tag = 'internal scratch']
  #allocation2 [shape = 'f32[64,256]{1,0:T(8,128)}', space=vmem, size = 0x10000, scoped, tag = 'scratch operand']
  %s0 = inlined_call_operand.vmem [shape: f32[1,1,4,256], index: 0, kind: input, shape index: {}]
  %s1 = inlined_call_operand.vmem [shape: f32[64,1], index: 1, kind: input, shape index: {}]
  %s2 = inlined_call_operand.vmem [shape: f32[1,64,1], index: 2, kind: output, shape index: {}]
  %s3 = sld [smem:[#allocation0]]
  $region34: #{tpu_custom_call.1} parent=0
    _
  %s5 = ssub.s32 1, %s3
  %s6 = scalar_select 0, %s5, %s3
  // Predicated region
  $region2: #{tpu_custom_call.1} parent=0 // pred_check
    _
  $region3: #{tpu_custom_call.1} parent=0 // pred_check_branch
    %8 = sbr.rel (0) target = $region5
  $region4: #{tpu_custom_call.1} parent=0 // pred_region
    _
  $region5: #{tpu_custom_call.1} parent=0 // pred_fallthru
    _
  // Predicated region
  $region6: #{tpu_custom_call.1} parent=0 // pred_check
    _
  $region7: #{tpu_custom_call.1} parent=0 // pred_check_branch
    %10 = sbr.rel (0) target = $region9
  $region8: #{tpu_custom_call.1} parent=0 // pred_region
    _
  $region9: #{tpu_custom_call.1} parent=0 // pred_fallthru
    _
  %p11 = scmp.eq.s32.totalorder 0, 0
  // Predicated region
  $region10: #{tpu_custom_call.1} parent=0 // pred_check
    %p12 = pneg %p11
  $region11: #{tpu_custom_call.1} parent=0 // pred_check_branch
    %14 = sbr.rel (%p12) target = $region13
  $region12: #{tpu_custom_call.1} parent=0 // pred_region
    %15 = vst [vmem:[#allocation2] sm:$0xff] 0.0
    %16 = vst [vmem:[#allocation2 + $0x8] sm:$0xff] 0.0
    %17 = vst [vmem:[#allocation2 + $0x10] sm:$0xff] 0.0
    %18 = vst [vmem:[#allocation2 + $0x18] sm:$0xff] 0.0
    %19 = vst [vmem:[#allocation2 + $0x20] sm:$0xff] 0.0
    %20 = vst [vmem:[#allocation2 + $0x28] sm:$0xff] 0.0
    %21 = vst [vmem:[#allocation2 + $0x30] sm:$0xff] 0.0
    %22 = vst [vmem:[#allocation2 + $0x38] sm:$0xff] 0.0
    %23 = vst [vmem:[#allocation2 + $0x40] sm:$0xff] 0.0
    %24 = vst [vmem:[#allocation2 + $0x48] sm:$0xff] 0.0
    %25 = vst [vmem:[#allocation2 + $0x50] sm:$0xff] 0.0
    %26 = vst [vmem:[#allocation2 + $0x58] sm:$0xff] 0.0
    %27 = vst [vmem:[#allocation2 + $0x60] sm:$0xff] 0.0
    %28 = vst [vmem:[#allocation2 + $0x68] sm:$0xff] 0.0
    %29 = vst [vmem:[#allocation2 + $0x70] sm:$0xff] 0.0
    %30 = vst [vmem:[#allocation2 + $0x78] sm:$0xff] 0.0
  $region13: #{tpu_custom_call.1} parent=0 // pred_fallthru
    _
  %v31 = vld [vmem:[%s1] sm:$0xff]
  %v32 = vld [vmem:[%s1 + $0x8] sm:$0xff]
  %v33 = vld [vmem:[%s1 + $0x10] sm:$0xff]
  %v34 = vld [vmem:[%s1 + $0x18] sm:$0xff]
  %v35 = vld [vmem:[%s1 + $0x20] sm:$0xff]
  %v36 = vld [vmem:[%s1 + $0x28] sm:$0xff]
  %v37 = vld [vmem:[%s1 + $0x30] sm:$0xff]
  %v38 = vld [vmem:[%s1 + $0x38] sm:$0xff]
  %40 = vset.pattern.permute.xlu0 0
  %41 = vperm.xlu0 %40, %v31
  %v42 = vpop.permute.xlu0 %41
  %45 = vset.pattern.permute.xlu0 0
  %46 = vperm.xlu0 %45, %v32
  %v47 = vpop.permute.xlu0 %46
  %50 = vset.pattern.permute.xlu0 0
  %51 = vperm.xlu0 %50, %v33
  %v52 = vpop.permute.xlu0 %51
  %55 = vset.pattern.permute.xlu0 0
  %56 = vperm.xlu0 %55, %v34
  %v57 = vpop.permute.xlu0 %56
  %60 = vset.pattern.permute.xlu0 0
  %61 = vperm.xlu0 %60, %v35
  %v62 = vpop.permute.xlu0 %61
  %65 = vset.pattern.permute.xlu0 0
  %66 = vperm.xlu0 %65, %v36
  %v67 = vpop.permute.xlu0 %66
  %70 = vset.pattern.permute.xlu0 0
  %71 = vperm.xlu0 %70, %v37
  %v72 = vpop.permute.xlu0 %71
  %75 = vset.pattern.permute.xlu0 0
  %76 = vperm.xlu0 %75, %v38
  %v77 = vpop.permute.xlu0 %76
  %s79 = sadd.s32 0, 0
  %s80 = smul.u32 %s79, 1024
  %s81 = sadd.s32 %s80, 1024
  %p82 = scmp.le.s32.totalorder %s81, 1024
  // Predicated region
  $region14: #{tpu_custom_call.1} parent=0 // pred_check
    %p83 = pneg %p82
  $region15: #{tpu_custom_call.1} parent=0 // pred_check_branch
    %85 = sbr.rel (%p83) target = $region17
  $region16: #{tpu_custom_call.1} parent=0 // pred_region
    %s86 = smul.u32 0, 2
    %s87 = smul.addr %s86, 4
    %s88 = scalar_lea.vmem %s0, %s87
    %v89 = vld [vmem:[%s88] ss:$4 sm:$0x3]
    %v91 = vperm.slane %v89, 0
    %v92 = vperm.slane %v89, 1
    %v95 = vsub.f32 %v91, %v42
    %v96 = vsub.f32 %v92, %v42
    %v97 = vsub.f32 %v91, %v47
    %v98 = vsub.f32 %v92, %v47
    %v99 = vsub.f32 %v91, %v52
    %v100 = vsub.f32 %v92, %v52
    %v101 = vsub.f32 %v91, %v57
    %v102 = vsub.f32 %v92, %v57
    %v103 = vsub.f32 %v91, %v62
    %v104 = vsub.f32 %v92, %v62
    %v105 = vsub.f32 %v91, %v67
    %v106 = vsub.f32 %v92, %v67
    %v107 = vsub.f32 %v91, %v72
    %v108 = vsub.f32 %v92, %v72
    %v109 = vsub.f32 %v91, %v77
    %v110 = vsub.f32 %v92, %v77
    %v111 = vmul.f32 %v95, %v95
    %v112 = vmul.f32 %v96, %v96
    %v113 = vmul.f32 %v97, %v97
    %v114 = vmul.f32 %v98, %v98
    %v115 = vmul.f32 %v99, %v99
    %v116 = vmul.f32 %v100, %v100
    %v117 = vmul.f32 %v101, %v101
    %v118 = vmul.f32 %v102, %v102
    %v119 = vmul.f32 %v103, %v103
    %v120 = vmul.f32 %v104, %v104
    %v121 = vmul.f32 %v105, %v105
    %v122 = vmul.f32 %v106, %v106
    %v123 = vmul.f32 %v107, %v107
    %v124 = vmul.f32 %v108, %v108
    %v125 = vmul.f32 %v109, %v109
    %v126 = vmul.f32 %v110, %v110
    %v127 = vmul.f32 %v111, -50.0
    %v128 = vmul.f32 %v112, -50.0
    %v129 = vmul.f32 %v113, -50.0
    %v130 = vmul.f32 %v114, -50.0
    %v131 = vmul.f32 %v115, -50.0
    %v132 = vmul.f32 %v116, -50.0
    %v133 = vmul.f32 %v117, -50.0
    %v134 = vmul.f32 %v118, -50.0
    %v135 = vmul.f32 %v119, -50.0
    %v136 = vmul.f32 %v120, -50.0
    %v137 = vmul.f32 %v121, -50.0
    %v138 = vmul.f32 %v122, -50.0
    %v139 = vmul.f32 %v123, -50.0
    %v140 = vmul.f32 %v124, -50.0
    %v141 = vmul.f32 %v125, -50.0
    %v142 = vmul.f32 %v126, -50.0
    %v143 = vmul.f32 %v127, 1.442695
    %v144 = vpow.pop %v143
    %v145 = vmul.f32 %v128, 1.442695
    %v146 = vpow.pop %v145
    %v147 = vmul.f32 %v129, 1.442695
    %v148 = vpow.pop %v147
    %v149 = vmul.f32 %v130, 1.442695
    %v150 = vpow.pop %v149
    %v151 = vmul.f32 %v131, 1.442695
    %v152 = vpow.pop %v151
    %v153 = vmul.f32 %v132, 1.442695
    %v154 = vpow.pop %v153
    %v155 = vmul.f32 %v133, 1.442695
    %v156 = vpow.pop %v155
    %v157 = vmul.f32 %v134, 1.442695
    %v158 = vpow.pop %v157
    %v159 = vmul.f32 %v135, 1.442695
    %v160 = vpow.pop %v159
    %v161 = vmul.f32 %v136, 1.442695
    %v162 = vpow.pop %v161
    %v163 = vmul.f32 %v137, 1.442695
    %v164 = vpow.pop %v163
    %v165 = vmul.f32 %v138, 1.442695
    %v166 = vpow.pop %v165
    %v167 = vmul.f32 %v139, 1.442695
    %v168 = vpow.pop %v167
    %v169 = vmul.f32 %v140, 1.442695
    %v170 = vpow.pop %v169
    %v171 = vmul.f32 %v141, 1.442695
    %v172 = vpow.pop %v171
    %v173 = vmul.f32 %v142, 1.442695
    %v174 = vpow.pop %v173
    %s175 = sadd.s32 0, 1
    %s176 = sshra.s32 %s175, 2
    %s177 = sand.u32 %s175, 3
    %s178 = sshra.s32 %s175, 2
    %s179 = sand.u32 %s175, 3
    %s180 = smul.u32 %s176, 2
    %s181 = smul.u32 %s180, 4
    %s182 = sadd.s32 %s181, %s179
    %s183 = scalar_lea.vmem %s0, %s182
    %v184 = vld [vmem:[%s183] ss:$4 sm:$0x3]
    %v186 = vperm.slane %v184, 0
    %v187 = vperm.slane %v184, 1
    %v190 = vsub.f32 %v186, %v42
    %v191 = vsub.f32 %v187, %v42
    %v192 = vsub.f32 %v186, %v47
    %v193 = vsub.f32 %v187, %v47
    %v194 = vsub.f32 %v186, %v52
    %v195 = vsub.f32 %v187, %v52
    %v196 = vsub.f32 %v186, %v57
    %v197 = vsub.f32 %v187, %v57
    %v198 = vsub.f32 %v186, %v62
    %v199 = vsub.f32 %v187, %v62
    %v200 = vsub.f32 %v186, %v67
    %v201 = vsub.f32 %v187, %v67
    %v202 = vsub.f32 %v186, %v72
    %v203 = vsub.f32 %v187, %v72
    %v204 = vsub.f32 %v186, %v77
    %v205 = vsub.f32 %v187, %v77
    %v206 = vmul.f32 %v190, %v190
    %v207 = vmul.f32 %v191, %v191
    %v208 = vmul.f32 %v192, %v192
    %v209 = vmul.f32 %v193, %v193
    %v210 = vmul.f32 %v194, %v194
    %v211 = vmul.f32 %v195, %v195
    %v212 = vmul.f32 %v196, %v196
    %v213 = vmul.f32 %v197, %v197
    %v214 = vmul.f32 %v198, %v198
    %v215 = vmul.f32 %v199, %v199
    %v216 = vmul.f32 %v200, %v200
    %v217 = vmul.f32 %v201, %v201
    %v218 = vmul.f32 %v202, %v202
    %v219 = vmul.f32 %v203, %v203
    %v220 = vmul.f32 %v204, %v204
    %v221 = vmul.f32 %v205, %v205
    %v222 = vmul.f32 %v206, -50.0
    %v223 = vmul.f32 %v207, -50.0
    %v224 = vmul.f32 %v208, -50.0
    %v225 = vmul.f32 %v209, -50.0
    %v226 = vmul.f32 %v210, -50.0
    %v227 = vmul.f32 %v211, -50.0
    %v228 = vmul.f32 %v212, -50.0
    %v229 = vmul.f32 %v213, -50.0
    %v230 = vmul.f32 %v214, -50.0
    %v231 = vmul.f32 %v215, -50.0
    %v232 = vmul.f32 %v216, -50.0
    %v233 = vmul.f32 %v217, -50.0
    %v234 = vmul.f32 %v218, -50.0
    %v235 = vmul.f32 %v219, -50.0
    %v236 = vmul.f32 %v220, -50.0
    %v237 = vmul.f32 %v221, -50.0
    %v238 = vmul.f32 %v222, 1.442695
    %v239 = vpow.pop %v238
    %v240 = vmul.f32 %v223, 1.442695
    %v241 = vpow.pop %v240
    %v242 = vmul.f32 %v224, 1.442695
    %v243 = vpow.pop %v242
    %v244 = vmul.f32 %v225, 1.442695
    %v245 = vpow.pop %v244
    %v246 = vmul.f32 %v226, 1.442695
    %v247 = vpow.pop %v246
    %v248 = vmul.f32 %v227, 1.442695
    %v249 = vpow.pop %v248
    %v250 = vmul.f32 %v228, 1.442695
    %v251 = vpow.pop %v250
    %v252 = vmul.f32 %v229, 1.442695
    %v253 = vpow.pop %v252
    %v254 = vmul.f32 %v230, 1.442695
    %v255 = vpow.pop %v254
    %v256 = vmul.f32 %v231, 1.442695
    %v257 = vpow.pop %v256
    %v258 = vmul.f32 %v232, 1.442695
    %v259 = vpow.pop %v258
    %v260 = vmul.f32 %v233, 1.442695
    %v261 = vpow.pop %v260
    %v262 = vmul.f32 %v234, 1.442695
    %v263 = vpow.pop %v262
    %v264 = vmul.f32 %v235, 1.442695
    %v265 = vpow.pop %v264
    %v266 = vmul.f32 %v236, 1.442695
    %v267 = vpow.pop %v266
    %v268 = vmul.f32 %v237, 1.442695
    %v269 = vpow.pop %v268
    %v270 = vadd.f32 %v144, %v239
    %v271 = vadd.f32 %v146, %v241
    %v272 = vadd.f32 %v148, %v243
    %v273 = vadd.f32 %v150, %v245
    %v274 = vadd.f32 %v152, %v247
    %v275 = vadd.f32 %v154, %v249
    %v276 = vadd.f32 %v156, %v251
    %v277 = vadd.f32 %v158, %v253
    %v278 = vadd.f32 %v160, %v255
    %v279 = vadd.f32 %v162, %v257
    %v280 = vadd.f32 %v164, %v259
    %v281 = vadd.f32 %v166, %v261
    %v282 = vadd.f32 %v168, %v263
    %v283 = vadd.f32 %v170, %v265
    %v284 = vadd.f32 %v172, %v267
    %v285 = vadd.f32 %v174, %v269
    %s286 = sadd.s32 0, 2
    %s287 = sshra.s32 %s286, 2
    %s288 = sand.u32 %s286, 3
    %s289 = sshra.s32 %s286, 2
    %s290 = sand.u32 %s286, 3
    %s291 = smul.u32 %s287, 2
    %s292 = smul.u32 %s291, 4
    %s293 = sadd.s32 %s292, %s290
    %s294 = scalar_lea.vmem %s0, %s293
    %v295 = vld [vmem:[%s294] ss:$4 sm:$0x3]
    %v297 = vperm.slane %v295, 0
    %v298 = vperm.slane %v295, 1
    %v301 = vsub.f32 %v297, %v42
    %v302 = vsub.f32 %v298, %v42
    %v303 = vsub.f32 %v297, %v47
    %v304 = vsub.f32 %v298, %v47
    %v305 = vsub.f32 %v297, %v52
    %v306 = vsub.f32 %v298, %v52
    %v307 = vsub.f32 %v297, %v57
    %v308 = vsub.f32 %v298, %v57
    %v309 = vsub.f32 %v297, %v62
    %v310 = vsub.f32 %v298, %v62
    %v311 = vsub.f32 %v297, %v67
    %v312 = vsub.f32 %v298, %v67
    %v313 = vsub.f32 %v297, %v72
    %v314 = vsub.f32 %v298, %v72
    %v315 = vsub.f32 %v297, %v77
    %v316 = vsub.f32 %v298, %v77
    %v317 = vmul.f32 %v301, %v301
    %v318 = vmul.f32 %v302, %v302
    %v319 = vmul.f32 %v303, %v303
    %v320 = vmul.f32 %v304, %v304
    %v321 = vmul.f32 %v305, %v305
    %v322 = vmul.f32 %v306, %v306
    %v323 = vmul.f32 %v307, %v307
    %v324 = vmul.f32 %v308, %v308
    %v325 = vmul.f32 %v309, %v309
    %v326 = vmul.f32 %v310, %v310
    %v327 = vmul.f32 %v311, %v311
    %v328 = vmul.f32 %v312, %v312
    %v329 = vmul.f32 %v313, %v313
    %v330 = vmul.f32 %v314, %v314
    %v331 = vmul.f32 %v315, %v315
    %v332 = vmul.f32 %v316, %v316
    %v333 = vmul.f32 %v317, -50.0
    %v334 = vmul.f32 %v318, -50.0
    %v335 = vmul.f32 %v319, -50.0
    %v336 = vmul.f32 %v320, -50.0
    %v337 = vmul.f32 %v321, -50.0
    %v338 = vmul.f32 %v322, -50.0
    %v339 = vmul.f32 %v323, -50.0
    %v340 = vmul.f32 %v324, -50.0
    %v341 = vmul.f32 %v325, -50.0
    %v342 = vmul.f32 %v326, -50.0
    %v343 = vmul.f32 %v327, -50.0
    %v344 = vmul.f32 %v328, -50.0
    %v345 = vmul.f32 %v329, -50.0
    %v346 = vmul.f32 %v330, -50.0
    %v347 = vmul.f32 %v331, -50.0
    %v348 = vmul.f32 %v332, -50.0
    %v349 = vmul.f32 %v333, 1.442695
    %v350 = vpow.pop %v349
    %v351 = vmul.f32 %v334, 1.442695
    %v352 = vpow.pop %v351
    %v353 = vmul.f32 %v335, 1.442695
    %v354 = vpow.pop %v353
    %v355 = vmul.f32 %v336, 1.442695
    %v356 = vpow.pop %v355
    %v357 = vmul.f32 %v337, 1.442695
    %v358 = vpow.pop %v357
    %v359 = vmul.f32 %v338, 1.442695
    %v360 = vpow.pop %v359
    %v361 = vmul.f32 %v339, 1.442695
    %v362 = vpow.pop %v361
    %v363 = vmul.f32 %v340, 1.442695
    %v364 = vpow.pop %v363
    %v365 = vmul.f32 %v341, 1.442695
    %v366 = vpow.pop %v365
    %v367 = vmul.f32 %v342, 1.442695
    %v368 = vpow.pop %v367
    %v369 = vmul.f32 %v343, 1.442695
    %v370 = vpow.pop %v369
    %v371 = vmul.f32 %v344, 1.442695
    %v372 = vpow.pop %v371
    %v373 = vmul.f32 %v345, 1.442695
    %v374 = vpow.pop %v373
    %v375 = vmul.f32 %v346, 1.442695
    %v376 = vpow.pop %v375
    %v377 = vmul.f32 %v347, 1.442695
    %v378 = vpow.pop %v377
    %v379 = vmul.f32 %v348, 1.442695
    %v380 = vpow.pop %v379
    %v381 = vadd.f32 %v270, %v350
    %v382 = vadd.f32 %v271, %v352
    %v383 = vadd.f32 %v272, %v354
    %v384 = vadd.f32 %v273, %v356
    %v385 = vadd.f32 %v274, %v358
    %v386 = vadd.f32 %v275, %v360
    %v387 = vadd.f32 %v276, %v362
    %v388 = vadd.f32 %v277, %v364
    %v389 = vadd.f32 %v278, %v366
    %v390 = vadd.f32 %v279, %v368
    %v391 = vadd.f32 %v280, %v370
    %v392 = vadd.f32 %v281, %v372
    %v393 = vadd.f32 %v282, %v374
    %v394 = vadd.f32 %v283, %v376
    %v395 = vadd.f32 %v284, %v378
    %v396 = vadd.f32 %v285, %v380
    %s397 = sadd.s32 0, 3
    %s398 = sshra.s32 %s397, 2
    %s399 = sand.u32 %s397, 3
    %s400 = sshra.s32 %s397, 2
    %s401 = sand.u32 %s397, 3
    %s402 = smul.u32 %s398, 2
    %s403 = smul.u32 %s402, 4
    %s404 = sadd.s32 %s403, %s401
    %s405 = scalar_lea.vmem %s0, %s404
    %v406 = vld [vmem:[%s405] ss:$4 sm:$0x3]
    %v408 = vperm.slane %v406, 0
    %v409 = vperm.slane %v406, 1
    %v412 = vsub.f32 %v408, %v42
    %v413 = vsub.f32 %v409, %v42
    %v414 = vsub.f32 %v408, %v47
    %v415 = vsub.f32 %v409, %v47
    %v416 = vsub.f32 %v408, %v52
    %v417 = vsub.f32 %v409, %v52
    %v418 = vsub.f32 %v408, %v57
    %v419 = vsub.f32 %v409, %v57
    %v420 = vsub.f32 %v408, %v62
    %v421 = vsub.f32 %v409, %v62
    %v422 = vsub.f32 %v408, %v67
    %v423 = vsub.f32 %v409, %v67
    %v424 = vsub.f32 %v408, %v72
    %v425 = vsub.f32 %v409, %v72
    %v426 = vsub.f32 %v408, %v77
    %v427 = vsub.f32 %v409, %v77
    %v428 = vmul.f32 %v412, %v412
    %v429 = vmul.f32 %v413, %v413
    %v430 = vmul.f32 %v414, %v414
    %v431 = vmul.f32 %v415, %v415
    %v432 = vmul.f32 %v416, %v416
    %v433 = vmul.f32 %v417, %v417
    %v434 = vmul.f32 %v418, %v418
    %v435 = vmul.f32 %v419, %v419
    %v436 = vmul.f32 %v420, %v420
    %v437 = vmul.f32 %v421, %v421
    %v438 = vmul.f32 %v422, %v422
    %v439 = vmul.f32 %v423, %v423
    %v440 = vmul.f32 %v424, %v424
    %v441 = vmul.f32 %v425, %v425
    %v442 = vmul.f32 %v426, %v426
    %v443 = vmul.f32 %v427, %v427
    %v444 = vmul.f32 %v428, -50.0
    %v445 = vmul.f32 %v429, -50.0
    %v446 = vmul.f32 %v430, -50.0
    %v447 = vmul.f32 %v431, -50.0
    %v448 = vmul.f32 %v432, -50.0
    %v449 = vmul.f32 %v433, -50.0
    %v450 = vmul.f32 %v434, -50.0
    %v451 = vmul.f32 %v435, -50.0
    %v452 = vmul.f32 %v436, -50.0
    %v453 = vmul.f32 %v437, -50.0
    %v454 = vmul.f32 %v438, -50.0
    %v455 = vmul.f32 %v439, -50.0
    %v456 = vmul.f32 %v440, -50.0
    %v457 = vmul.f32 %v441, -50.0
    %v458 = vmul.f32 %v442, -50.0
    %v459 = vmul.f32 %v443, -50.0
    %v460 = vmul.f32 %v444, 1.442695
    %v461 = vpow.pop %v460
    %v462 = vmul.f32 %v445, 1.442695
    %v463 = vpow.pop %v462
    %v464 = vmul.f32 %v446, 1.442695
    %v465 = vpow.pop %v464
    %v466 = vmul.f32 %v447, 1.442695
    %v467 = vpow.pop %v466
    %v468 = vmul.f32 %v448, 1.442695
    %v469 = vpow.pop %v468
    %v470 = vmul.f32 %v449, 1.442695
    %v471 = vpow.pop %v470
    %v472 = vmul.f32 %v450, 1.442695
    %v473 = vpow.pop %v472
    %v474 = vmul.f32 %v451, 1.442695
    %v475 = vpow.pop %v474
    %v476 = vmul.f32 %v452, 1.442695
    %v477 = vpow.pop %v476
    %v478 = vmul.f32 %v453, 1.442695
    %v479 = vpow.pop %v478
    %v480 = vmul.f32 %v454, 1.442695
    %v481 = vpow.pop %v480
    %v482 = vmul.f32 %v455, 1.442695
    %v483 = vpow.pop %v482
    %v484 = vmul.f32 %v456, 1.442695
    %v485 = vpow.pop %v484
    %v486 = vmul.f32 %v457, 1.442695
    %v487 = vpow.pop %v486
    %v488 = vmul.f32 %v458, 1.442695
    %v489 = vpow.pop %v488
    %v490 = vmul.f32 %v459, 1.442695
    %v491 = vpow.pop %v490
    %v492 = vadd.f32 %v381, %v461
    %v493 = vadd.f32 %v382, %v463
    %v494 = vadd.f32 %v383, %v465
    %v495 = vadd.f32 %v384, %v467
    %v496 = vadd.f32 %v385, %v469
    %v497 = vadd.f32 %v386, %v471
    %v498 = vadd.f32 %v387, %v473
    %v499 = vadd.f32 %v388, %v475
    %v500 = vadd.f32 %v389, %v477
    %v501 = vadd.f32 %v390, %v479
    %v502 = vadd.f32 %v391, %v481
    %v503 = vadd.f32 %v392, %v483
    %v504 = vadd.f32 %v393, %v485
    %v505 = vadd.f32 %v394, %v487
    %v506 = vadd.f32 %v395, %v489
    %v507 = vadd.f32 %v396, %v491
    %v508 = vld [vmem:[#allocation2] sm:$0xff]
    %v509 = vld [vmem:[#allocation2 + $0x8] sm:$0xff]
    %v510 = vld [vmem:[#allocation2 + $0x10] sm:$0xff]
    %v511 = vld [vmem:[#allocation2 + $0x18] sm:$0xff]
    %v512 = vld [vmem:[#allocation2 + $0x20] sm:$0xff]
    %v513 = vld [vmem:[#allocation2 + $0x28] sm:$0xff]
    %v514 = vld [vmem:[#allocation2 + $0x30] sm:$0xff]
    %v515 = vld [vmem:[#allocation2 + $0x38] sm:$0xff]
    %v516 = vld [vmem:[#allocation2 + $0x40] sm:$0xff]
    %v517 = vld [vmem:[#allocation2 + $0x48] sm:$0xff]
    %v518 = vld [vmem:[#allocation2 + $0x50] sm:$0xff]
    %v519 = vld [vmem:[#allocation2 + $0x58] sm:$0xff]
    %v520 = vld [vmem:[#allocation2 + $0x60] sm:$0xff]
    %v521 = vld [vmem:[#allocation2 + $0x68] sm:$0xff]
    %v522 = vld [vmem:[#allocation2 + $0x70] sm:$0xff]
    %v523 = vld [vmem:[#allocation2 + $0x78] sm:$0xff]
    %v524 = vadd.f32 %v508, %v492
    %v525 = vadd.f32 %v509, %v493
    %v526 = vadd.f32 %v510, %v494
    %v527 = vadd.f32 %v511, %v495
    %v528 = vadd.f32 %v512, %v496
    %v529 = vadd.f32 %v513, %v497
    %v530 = vadd.f32 %v514, %v498
    %v531 = vadd.f32 %v515, %v499
    %v532 = vadd.f32 %v516, %v500
    %v533 = vadd.f32 %v517, %v501
    %v534 = vadd.f32 %v518, %v502
    %v535 = vadd.f32 %v519, %v503
    %v536 = vadd.f32 %v520, %v504
    %v537 = vadd.f32 %v521, %v505
    %v538 = vadd.f32 %v522, %v506
    %v539 = vadd.f32 %v523, %v507
    %540 = vst [vmem:[#allocation2] sm:$0xff] %v524
    %541 = vst [vmem:[#allocation2 + $0x8] sm:$0xff] %v525
    %542 = vst [vmem:[#allocation2 + $0x10] sm:$0xff] %v526
    %543 = vst [vmem:[#allocation2 + $0x18] sm:$0xff] %v527
    %544 = vst [vmem:[#allocation2 + $0x20] sm:$0xff] %v528
    %545 = vst [vmem:[#allocation2 + $0x28] sm:$0xff] %v529
    %546 = vst [vmem:[#allocation2 + $0x30] sm:$0xff] %v530
    %547 = vst [vmem:[#allocation2 + $0x38] sm:$0xff] %v531
    %548 = vst [vmem:[#allocation2 + $0x40] sm:$0xff] %v532
    %549 = vst [vmem:[#allocation2 + $0x48] sm:$0xff] %v533
    %550 = vst [vmem:[#allocation2 + $0x50] sm:$0xff] %v534
    %551 = vst [vmem:[#allocation2 + $0x58] sm:$0xff] %v535
    %552 = vst [vmem:[#allocation2 + $0x60] sm:$0xff] %v536
    %553 = vst [vmem:[#allocation2 + $0x68] sm:$0xff] %v537
    %554 = vst [vmem:[#allocation2 + $0x70] sm:$0xff] %v538
    %555 = vst [vmem:[#allocation2 + $0x78] sm:$0xff] %v539
  $region17: #{tpu_custom_call.1} parent=0 // pred_fallthru
    _
  %p556 = scmp.lt.s32.totalorder %s80, 1024
  %p557 = scmp.gt.s32.totalorder %s81, 1024
  %p558 = pnand %p556, %p557
  %p559 = pneg %p558
  // Predicated region
  $region18: #{tpu_custom_call.1} parent=0 // pred_check
    _
  $region19: #{tpu_custom_call.1} parent=0 // pred_check_branch
    %561 = sbr.rel (%p558) target = $region21
  $region20: #{tpu_custom_call.1} parent=0 // pred_region
    %v562 = vlaneseq
    %v563 = vand.u32 %v562, 127
    %v564 = vadd.s32 %v563, 128
    %s565 = smul.u32 0, 2
    %s566 = smul.addr %s565, 4
    %s567 = scalar_lea.vmem %s0, %s566
    %v568 = vld [vmem:[%s567] ss:$4 sm:$0x3]
    %v570 = vperm.slane %v568, 0
    %v571 = vperm.slane %v568, 1
    %v574 = vsub.f32 %v570, %v42
    %v575 = vsub.f32 %v571, %v42
    %v576 = vsub.f32 %v570, %v47
    %v577 = vsub.f32 %v571, %v47
    %v578 = vsub.f32 %v570, %v52
    %v579 = vsub.f32 %v571, %v52
    %v580 = vsub.f32 %v570, %v57
    %v581 = vsub.f32 %v571, %v57
    %v582 = vsub.f32 %v570, %v62
    %v583 = vsub.f32 %v571, %v62
    %v584 = vsub.f32 %v570, %v67
    %v585 = vsub.f32 %v571, %v67
    %v586 = vsub.f32 %v570, %v72
    %v587 = vsub.f32 %v571, %v72
    %v588 = vsub.f32 %v570, %v77
    %v589 = vsub.f32 %v571, %v77
    %v590 = vmul.f32 %v574, %v574
    %v591 = vmul.f32 %v575, %v575
    %v592 = vmul.f32 %v576, %v576
    %v593 = vmul.f32 %v577, %v577
    %v594 = vmul.f32 %v578, %v578
    %v595 = vmul.f32 %v579, %v579
    %v596 = vmul.f32 %v580, %v580
    %v597 = vmul.f32 %v581, %v581
    %v598 = vmul.f32 %v582, %v582
    %v599 = vmul.f32 %v583, %v583
    %v600 = vmul.f32 %v584, %v584
    %v601 = vmul.f32 %v585, %v585
    %v602 = vmul.f32 %v586, %v586
    %v603 = vmul.f32 %v587, %v587
    %v604 = vmul.f32 %v588, %v588
    %v605 = vmul.f32 %v589, %v589
    %v606 = vmul.f32 %v590, -50.0
    %v607 = vmul.f32 %v591, -50.0
    %v608 = vmul.f32 %v592, -50.0
    %v609 = vmul.f32 %v593, -50.0
    %v610 = vmul.f32 %v594, -50.0
    %v611 = vmul.f32 %v595, -50.0
    %v612 = vmul.f32 %v596, -50.0
    %v613 = vmul.f32 %v597, -50.0
    %v614 = vmul.f32 %v598, -50.0
    %v615 = vmul.f32 %v599, -50.0
    %v616 = vmul.f32 %v600, -50.0
    %v617 = vmul.f32 %v601, -50.0
    %v618 = vmul.f32 %v602, -50.0
    %v619 = vmul.f32 %v603, -50.0
    %v620 = vmul.f32 %v604, -50.0
    %v621 = vmul.f32 %v605, -50.0
    %v622 = vmul.f32 %v606, 1.442695
    %v623 = vpow.pop %v622
    %v624 = vmul.f32 %v607, 1.442695
    %v625 = vpow.pop %v624
    %v626 = vmul.f32 %v608, 1.442695
    %v627 = vpow.pop %v626
    %v628 = vmul.f32 %v609, 1.442695
    %v629 = vpow.pop %v628
    %v630 = vmul.f32 %v610, 1.442695
    %v631 = vpow.pop %v630
    %v632 = vmul.f32 %v611, 1.442695
    %v633 = vpow.pop %v632
    %v634 = vmul.f32 %v612, 1.442695
    %v635 = vpow.pop %v634
    %v636 = vmul.f32 %v613, 1.442695
    %v637 = vpow.pop %v636
    %v638 = vmul.f32 %v614, 1.442695
    %v639 = vpow.pop %v638
    %v640 = vmul.f32 %v615, 1.442695
    %v641 = vpow.pop %v640
    %v642 = vmul.f32 %v616, 1.442695
    %v643 = vpow.pop %v642
    %v644 = vmul.f32 %v617, 1.442695
    %v645 = vpow.pop %v644
    %v646 = vmul.f32 %v618, 1.442695
    %v647 = vpow.pop %v646
    %v648 = vmul.f32 %v619, 1.442695
    %v649 = vpow.pop %v648
    %v650 = vmul.f32 %v620, 1.442695
    %v651 = vpow.pop %v650
    %v652 = vmul.f32 %v621, 1.442695
    %v653 = vpow.pop %v652
    %s654 = smul.u32 0, 256
    %s655 = sadd.s32 %s80, %s654
    %s656 = ssub.s32 1024, %s655
    %v657 = vstv %s656
    %vm658 = vcmp.lt.s32.totalorder %v563, %v657
    %vm659 = vcmp.lt.s32.totalorder %v564, %v657
    %v660 = vsel %vm658, 1, 0
    %v661 = vsel %vm659, 1, 0
    %vm662 = vcmp.eq.s32.totalorder %v660, 1
    %vm663 = vcmp.eq.s32.totalorder %v661, 1
    %v664 = vsel %vm662, %v623, 0.0
    %v665 = vsel %vm663, %v625, 0.0
    %v666 = vsel %vm662, %v627, 0.0
    %v667 = vsel %vm663, %v629, 0.0
    %v668 = vsel %vm662, %v631, 0.0
    %v669 = vsel %vm663, %v633, 0.0
    %v670 = vsel %vm662, %v635, 0.0
    %v671 = vsel %vm663, %v637, 0.0
    %v672 = vsel %vm662, %v639, 0.0
    %v673 = vsel %vm663, %v641, 0.0
    %v674 = vsel %vm662, %v643, 0.0
    %v675 = vsel %vm663, %v645, 0.0
    %v676 = vsel %vm662, %v647, 0.0
    %v677 = vsel %vm663, %v649, 0.0
    %v678 = vsel %vm662, %v651, 0.0
    %v679 = vsel %vm663, %v653, 0.0
    %s680 = sadd.s32 0, 1
    %s681 = sshra.s32 %s680, 2
    %s682 = sand.u32 %s680, 3
    %s683 = sshra.s32 %s680, 2
    %s684 = sand.u32 %s680, 3
    %s685 = smul.u32 %s681, 2
    %s686 = smul.u32 %s685, 4
    %s687 = sadd.s32 %s686, %s684
    %s688 = scalar_lea.vmem %s0, %s687
    %v689 = vld [vmem:[%s688] ss:$4 sm:$0x3]
    %v691 = vperm.slane %v689, 0
    %v692 = vperm.slane %v689, 1
    %v695 = vsub.f32 %v691, %v42
    %v696 = vsub.f32 %v692, %v42
    %v697 = vsub.f32 %v691, %v47
    %v698 = vsub.f32 %v692, %v47
    %v699 = vsub.f32 %v691, %v52
    %v700 = vsub.f32 %v692, %v52
    %v701 = vsub.f32 %v691, %v57
    %v702 = vsub.f32 %v692, %v57
    %v703 = vsub.f32 %v691, %v62
    %v704 = vsub.f32 %v692, %v62
    %v705 = vsub.f32 %v691, %v67
    %v706 = vsub.f32 %v692, %v67
    %v707 = vsub.f32 %v691, %v72
    %v708 = vsub.f32 %v692, %v72
    %v709 = vsub.f32 %v691, %v77
    %v710 = vsub.f32 %v692, %v77
    %v711 = vmul.f32 %v695, %v695
    %v712 = vmul.f32 %v696, %v696
    %v713 = vmul.f32 %v697, %v697
    %v714 = vmul.f32 %v698, %v698
    %v715 = vmul.f32 %v699, %v699
    %v716 = vmul.f32 %v700, %v700
    %v717 = vmul.f32 %v701, %v701
    %v718 = vmul.f32 %v702, %v702
    %v719 = vmul.f32 %v703, %v703
    %v720 = vmul.f32 %v704, %v704
    %v721 = vmul.f32 %v705, %v705
    %v722 = vmul.f32 %v706, %v706
    %v723 = vmul.f32 %v707, %v707
    %v724 = vmul.f32 %v708, %v708
    %v725 = vmul.f32 %v709, %v709
    %v726 = vmul.f32 %v710, %v710
    %v727 = vmul.f32 %v711, -50.0
    %v728 = vmul.f32 %v712, -50.0
    %v729 = vmul.f32 %v713, -50.0
    %v730 = vmul.f32 %v714, -50.0
    %v731 = vmul.f32 %v715, -50.0
    %v732 = vmul.f32 %v716, -50.0
    %v733 = vmul.f32 %v717, -50.0
    %v734 = vmul.f32 %v718, -50.0
    %v735 = vmul.f32 %v719, -50.0
    %v736 = vmul.f32 %v720, -50.0
    %v737 = vmul.f32 %v721, -50.0
    %v738 = vmul.f32 %v722, -50.0
    %v739 = vmul.f32 %v723, -50.0
    %v740 = vmul.f32 %v724, -50.0
    %v741 = vmul.f32 %v725, -50.0
    %v742 = vmul.f32 %v726, -50.0
    %v743 = vmul.f32 %v727, 1.442695
    %v744 = vpow.pop %v743
    %v745 = vmul.f32 %v728, 1.442695
    %v746 = vpow.pop %v745
    %v747 = vmul.f32 %v729, 1.442695
    %v748 = vpow.pop %v747
    %v749 = vmul.f32 %v730, 1.442695
    %v750 = vpow.pop %v749
    %v751 = vmul.f32 %v731, 1.442695
    %v752 = vpow.pop %v751
    %v753 = vmul.f32 %v732, 1.442695
    %v754 = vpow.pop %v753
    %v755 = vmul.f32 %v733, 1.442695
    %v756 = vpow.pop %v755
    %v757 = vmul.f32 %v734, 1.442695
    %v758 = vpow.pop %v757
    %v759 = vmul.f32 %v735, 1.442695
    %v760 = vpow.pop %v759
    %v761 = vmul.f32 %v736, 1.442695
    %v762 = vpow.pop %v761
    %v763 = vmul.f32 %v737, 1.442695
    %v764 = vpow.pop %v763
    %v765 = vmul.f32 %v738, 1.442695
    %v766 = vpow.pop %v765
    %v767 = vmul.f32 %v739, 1.442695
    %v768 = vpow.pop %v767
    %v769 = vmul.f32 %v740, 1.442695
    %v770 = vpow.pop %v769
    %v771 = vmul.f32 %v741, 1.442695
    %v772 = vpow.pop %v771
    %v773 = vmul.f32 %v742, 1.442695
    %v774 = vpow.pop %v773
    %s775 = smul.u32 %s680, 256
    %s776 = sadd.s32 %s80, %s775
    %s777 = ssub.s32 1024, %s776
    %v778 = vstv %s777
    %vm779 = vcmp.lt.s32.totalorder %v563, %v778
    %vm780 = vcmp.lt.s32.totalorder %v564, %v778
    %v781 = vsel %vm779, 1, 0
    %v782 = vsel %vm780, 1, 0
    %vm783 = vcmp.eq.s32.totalorder %v781, 1
    %vm784 = vcmp.eq.s32.totalorder %v782, 1
    %v785 = vsel %vm783, %v744, 0.0
    %v786 = vsel %vm784, %v746, 0.0
    %v787 = vsel %vm783, %v748, 0.0
    %v788 = vsel %vm784, %v750, 0.0
    %v789 = vsel %vm783, %v752, 0.0
    %v790 = vsel %vm784, %v754, 0.0
    %v791 = vsel %vm783, %v756, 0.0
    %v792 = vsel %vm784, %v758, 0.0
    %v793 = vsel %vm783, %v760, 0.0
    %v794 = vsel %vm784, %v762, 0.0
    %v795 = vsel %vm783, %v764, 0.0
    %v796 = vsel %vm784, %v766, 0.0
    %v797 = vsel %vm783, %v768, 0.0
    %v798 = vsel %vm784, %v770, 0.0
    %v799 = vsel %vm783, %v772, 0.0
    %v800 = vsel %vm784, %v774, 0.0
    %v801 = vadd.f32 %v664, %v785
    %v802 = vadd.f32 %v665, %v786
    %v803 = vadd.f32 %v666, %v787
    %v804 = vadd.f32 %v667, %v788
    %v805 = vadd.f32 %v668, %v789
    %v806 = vadd.f32 %v669, %v790
    %v807 = vadd.f32 %v670, %v791
    %v808 = vadd.f32 %v671, %v792
    %v809 = vadd.f32 %v672, %v793
    %v810 = vadd.f32 %v673, %v794
    %v811 = vadd.f32 %v674, %v795
    %v812 = vadd.f32 %v675, %v796
    %v813 = vadd.f32 %v676, %v797
    %v814 = vadd.f32 %v677, %v798
    %v815 = vadd.f32 %v678, %v799
    %v816 = vadd.f32 %v679, %v800
    %s817 = sadd.s32 0, 2
    %s818 = sshra.s32 %s817, 2
    %s819 = sand.u32 %s817, 3
    %s820 = sshra.s32 %s817, 2
    %s821 = sand.u32 %s817, 3
    %s822 = smul.u32 %s818, 2
    %s823 = smul.u32 %s822, 4
    %s824 = sadd.s32 %s823, %s821
    %s825 = scalar_lea.vmem %s0, %s824
    %v826 = vld [vmem:[%s825] ss:$4 sm:$0x3]
    %v828 = vperm.slane %v826, 0
    %v829 = vperm.slane %v826, 1
    %v832 = vsub.f32 %v828, %v42
    %v833 = vsub.f32 %v829, %v42
    %v834 = vsub.f32 %v828, %v47
    %v835 = vsub.f32 %v829, %v47
    %v836 = vsub.f32 %v828, %v52
    %v837 = vsub.f32 %v829, %v52
    %v838 = vsub.f32 %v828, %v57
    %v839 = vsub.f32 %v829, %v57
    %v840 = vsub.f32 %v828, %v62
    %v841 = vsub.f32 %v829, %v62
    %v842 = vsub.f32 %v828, %v67
    %v843 = vsub.f32 %v829, %v67
    %v844 = vsub.f32 %v828, %v72
    %v845 = vsub.f32 %v829, %v72
    %v846 = vsub.f32 %v828, %v77
    %v847 = vsub.f32 %v829, %v77
    %v848 = vmul.f32 %v832, %v832
    %v849 = vmul.f32 %v833, %v833
    %v850 = vmul.f32 %v834, %v834
    %v851 = vmul.f32 %v835, %v835
    %v852 = vmul.f32 %v836, %v836
    %v853 = vmul.f32 %v837, %v837
    %v854 = vmul.f32 %v838, %v838
    %v855 = vmul.f32 %v839, %v839
    %v856 = vmul.f32 %v840, %v840
    %v857 = vmul.f32 %v841, %v841
    %v858 = vmul.f32 %v842, %v842
    %v859 = vmul.f32 %v843, %v843
    %v860 = vmul.f32 %v844, %v844
    %v861 = vmul.f32 %v845, %v845
    %v862 = vmul.f32 %v846, %v846
    %v863 = vmul.f32 %v847, %v847
    %v864 = vmul.f32 %v848, -50.0
    %v865 = vmul.f32 %v849, -50.0
    %v866 = vmul.f32 %v850, -50.0
    %v867 = vmul.f32 %v851, -50.0
    %v868 = vmul.f32 %v852, -50.0
    %v869 = vmul.f32 %v853, -50.0
    %v870 = vmul.f32 %v854, -50.0
    %v871 = vmul.f32 %v855, -50.0
    %v872 = vmul.f32 %v856, -50.0
    %v873 = vmul.f32 %v857, -50.0
    %v874 = vmul.f32 %v858, -50.0
    %v875 = vmul.f32 %v859, -50.0
    %v876 = vmul.f32 %v860, -50.0
    %v877 = vmul.f32 %v861, -50.0
    %v878 = vmul.f32 %v862, -50.0
    %v879 = vmul.f32 %v863, -50.0
    %v880 = vmul.f32 %v864, 1.442695
    %v881 = vpow.pop %v880
    %v882 = vmul.f32 %v865, 1.442695
    %v883 = vpow.pop %v882
    %v884 = vmul.f32 %v866, 1.442695
    %v885 = vpow.pop %v884
    %v886 = vmul.f32 %v867, 1.442695
    %v887 = vpow.pop %v886
    %v888 = vmul.f32 %v868, 1.442695
    %v889 = vpow.pop %v888
    %v890 = vmul.f32 %v869, 1.442695
    %v891 = vpow.pop %v890
    %v892 = vmul.f32 %v870, 1.442695
    %v893 = vpow.pop %v892
    %v894 = vmul.f32 %v871, 1.442695
    %v895 = vpow.pop %v894
    %v896 = vmul.f32 %v872, 1.442695
    %v897 = vpow.pop %v896
    %v898 = vmul.f32 %v873, 1.442695
    %v899 = vpow.pop %v898
    %v900 = vmul.f32 %v874, 1.442695
    %v901 = vpow.pop %v900
    %v902 = vmul.f32 %v875, 1.442695
    %v903 = vpow.pop %v902
    %v904 = vmul.f32 %v876, 1.442695
    %v905 = vpow.pop %v904
    %v906 = vmul.f32 %v877, 1.442695
    %v907 = vpow.pop %v906
    %v908 = vmul.f32 %v878, 1.442695
    %v909 = vpow.pop %v908
    %v910 = vmul.f32 %v879, 1.442695
    %v911 = vpow.pop %v910
    %s912 = smul.u32 %s817, 256
    %s913 = sadd.s32 %s80, %s912
    %s914 = ssub.s32 1024, %s913
    %v915 = vstv %s914
    %vm916 = vcmp.lt.s32.totalorder %v563, %v915
    %vm917 = vcmp.lt.s32.totalorder %v564, %v915
    %v918 = vsel %vm916, 1, 0
    %v919 = vsel %vm917, 1, 0
    %vm920 = vcmp.eq.s32.totalorder %v918, 1
    %vm921 = vcmp.eq.s32.totalorder %v919, 1
    %v922 = vsel %vm920, %v881, 0.0
    %v923 = vsel %vm921, %v883, 0.0
    %v924 = vsel %vm920, %v885, 0.0
    %v925 = vsel %vm921, %v887, 0.0
    %v926 = vsel %vm920, %v889, 0.0
    %v927 = vsel %vm921, %v891, 0.0
    %v928 = vsel %vm920, %v893, 0.0
    %v929 = vsel %vm921, %v895, 0.0
    %v930 = vsel %vm920, %v897, 0.0
    %v931 = vsel %vm921, %v899, 0.0
    %v932 = vsel %vm920, %v901, 0.0
    %v933 = vsel %vm921, %v903, 0.0
    %v934 = vsel %vm920, %v905, 0.0
    %v935 = vsel %vm921, %v907, 0.0
    %v936 = vsel %vm920, %v909, 0.0
    %v937 = vsel %vm921, %v911, 0.0
    %v938 = vadd.f32 %v801, %v922
    %v939 = vadd.f32 %v802, %v923
    %v940 = vadd.f32 %v803, %v924
    %v941 = vadd.f32 %v804, %v925
    %v942 = vadd.f32 %v805, %v926
    %v943 = vadd.f32 %v806, %v927
    %v944 = vadd.f32 %v807, %v928
    %v945 = vadd.f32 %v808, %v929
    %v946 = vadd.f32 %v809, %v930
    %v947 = vadd.f32 %v810, %v931
    %v948 = vadd.f32 %v811, %v932
    %v949 = vadd.f32 %v812, %v933
    %v950 = vadd.f32 %v813, %v934
    %v951 = vadd.f32 %v814, %v935
    %v952 = vadd.f32 %v815, %v936
    %v953 = vadd.f32 %v816, %v937
    %s954 = sadd.s32 0, 3
    %s955 = sshra.s32 %s954, 2
    %s956 = sand.u32 %s954, 3
    %s957 = sshra.s32 %s954, 2
    %s958 = sand.u32 %s954, 3
    %s959 = smul.u32 %s955, 2
    %s960 = smul.u32 %s959, 4
    %s961 = sadd.s32 %s960, %s958
    %s962 = scalar_lea.vmem %s0, %s961
    %v963 = vld [vmem:[%s962] ss:$4 sm:$0x3]
    %v965 = vperm.slane %v963, 0
    %v966 = vperm.slane %v963, 1
    %v969 = vsub.f32 %v965, %v42
    %v970 = vsub.f32 %v966, %v42
    %v971 = vsub.f32 %v965, %v47
    %v972 = vsub.f32 %v966, %v47
    %v973 = vsub.f32 %v965, %v52
    %v974 = vsub.f32 %v966, %v52
    %v975 = vsub.f32 %v965, %v57
    %v976 = vsub.f32 %v966, %v57
    %v977 = vsub.f32 %v965, %v62
    %v978 = vsub.f32 %v966, %v62
    %v979 = vsub.f32 %v965, %v67
    %v980 = vsub.f32 %v966, %v67
    %v981 = vsub.f32 %v965, %v72
    %v982 = vsub.f32 %v966, %v72
    %v983 = vsub.f32 %v965, %v77
    %v984 = vsub.f32 %v966, %v77
    %v985 = vmul.f32 %v969, %v969
    %v986 = vmul.f32 %v970, %v970
    %v987 = vmul.f32 %v971, %v971
    %v988 = vmul.f32 %v972, %v972
    %v989 = vmul.f32 %v973, %v973
    %v990 = vmul.f32 %v974, %v974
    %v991 = vmul.f32 %v975, %v975
    %v992 = vmul.f32 %v976, %v976
    %v993 = vmul.f32 %v977, %v977
    %v994 = vmul.f32 %v978, %v978
    %v995 = vmul.f32 %v979, %v979
    %v996 = vmul.f32 %v980, %v980
    %v997 = vmul.f32 %v981, %v981
    %v998 = vmul.f32 %v982, %v982
    %v999 = vmul.f32 %v983, %v983
    %v1000 = vmul.f32 %v984, %v984
    %v1001 = vmul.f32 %v985, -50.0
    %v1002 = vmul.f32 %v986, -50.0
    %v1003 = vmul.f32 %v987, -50.0
    %v1004 = vmul.f32 %v988, -50.0
    %v1005 = vmul.f32 %v989, -50.0
    %v1006 = vmul.f32 %v990, -50.0
    %v1007 = vmul.f32 %v991, -50.0
    %v1008 = vmul.f32 %v992, -50.0
    %v1009 = vmul.f32 %v993, -50.0
    %v1010 = vmul.f32 %v994, -50.0
    %v1011 = vmul.f32 %v995, -50.0
    %v1012 = vmul.f32 %v996, -50.0
    %v1013 = vmul.f32 %v997, -50.0
    %v1014 = vmul.f32 %v998, -50.0
    %v1015 = vmul.f32 %v999, -50.0
    %v1016 = vmul.f32 %v1000, -50.0
    %v1017 = vmul.f32 %v1001, 1.442695
    %v1018 = vpow.pop %v1017
    %v1019 = vmul.f32 %v1002, 1.442695
    %v1020 = vpow.pop %v1019
    %v1021 = vmul.f32 %v1003, 1.442695
    %v1022 = vpow.pop %v1021
    %v1023 = vmul.f32 %v1004, 1.442695
    %v1024 = vpow.pop %v1023
    %v1025 = vmul.f32 %v1005, 1.442695
    %v1026 = vpow.pop %v1025
    %v1027 = vmul.f32 %v1006, 1.442695
    %v1028 = vpow.pop %v1027
    %v1029 = vmul.f32 %v1007, 1.442695
    %v1030 = vpow.pop %v1029
    %v1031 = vmul.f32 %v1008, 1.442695
    %v1032 = vpow.pop %v1031
    %v1033 = vmul.f32 %v1009, 1.442695
    %v1034 = vpow.pop %v1033
    %v1035 = vmul.f32 %v1010, 1.442695
    %v1036 = vpow.pop %v1035
    %v1037 = vmul.f32 %v1011, 1.442695
    %v1038 = vpow.pop %v1037
    %v1039 = vmul.f32 %v1012, 1.442695
    %v1040 = vpow.pop %v1039
    %v1041 = vmul.f32 %v1013, 1.442695
    %v1042 = vpow.pop %v1041
    %v1043 = vmul.f32 %v1014, 1.442695
    %v1044 = vpow.pop %v1043
    %v1045 = vmul.f32 %v1015, 1.442695
    %v1046 = vpow.pop %v1045
    %v1047 = vmul.f32 %v1016, 1.442695
    %v1048 = vpow.pop %v1047
    %s1049 = smul.u32 %s954, 256
    %s1050 = sadd.s32 %s80, %s1049
    %s1051 = ssub.s32 1024, %s1050
    %v1052 = vstv %s1051
    %vm1053 = vcmp.lt.s32.totalorder %v563, %v1052
    %vm1054 = vcmp.lt.s32.totalorder %v564, %v1052
    %v1055 = vsel %vm1053, 1, 0
    %v1056 = vsel %vm1054, 1, 0
    %vm1057 = vcmp.eq.s32.totalorder %v1055, 1
    %vm1058 = vcmp.eq.s32.totalorder %v1056, 1
    %v1059 = vsel %vm1057, %v1018, 0.0
    %v1060 = vsel %vm1058, %v1020, 0.0
    %v1061 = vsel %vm1057, %v1022, 0.0
    %v1062 = vsel %vm1058, %v1024, 0.0
    %v1063 = vsel %vm1057, %v1026, 0.0
    %v1064 = vsel %vm1058, %v1028, 0.0
    %v1065 = vsel %vm1057, %v1030, 0.0
    %v1066 = vsel %vm1058, %v1032, 0.0
    %v1067 = vsel %vm1057, %v1034, 0.0
    %v1068 = vsel %vm1058, %v1036, 0.0
    %v1069 = vsel %vm1057, %v1038, 0.0
    %v1070 = vsel %vm1058, %v1040, 0.0
    %v1071 = vsel %vm1057, %v1042, 0.0
    %v1072 = vsel %vm1058, %v1044, 0.0
    %v1073 = vsel %vm1057, %v1046, 0.0
    %v1074 = vsel %vm1058, %v1048, 0.0
    %v1075 = vadd.f32 %v938, %v1059
    %v1076 = vadd.f32 %v939, %v1060
    %v1077 = vadd.f32 %v940, %v1061
    %v1078 = vadd.f32 %v941, %v1062
    %v1079 = vadd.f32 %v942, %v1063
    %v1080 = vadd.f32 %v943, %v1064
    %v1081 = vadd.f32 %v944, %v1065
    %v1082 = vadd.f32 %v945, %v1066
    %v1083 = vadd.f32 %v946, %v1067
    %v1084 = vadd.f32 %v947, %v1068
    %v1085 = vadd.f32 %v948, %v1069
    %v1086 = vadd.f32 %v949, %v1070
    %v1087 = vadd.f32 %v950, %v1071
    %v1088 = vadd.f32 %v951, %v1072
    %v1089 = vadd.f32 %v952, %v1073
    %v1090 = vadd.f32 %v953, %v1074
    %v1091 = vld [vmem:[#allocation2] sm:$0xff]
    %v1092 = vld [vmem:[#allocation2 + $0x8] sm:$0xff]
    %v1093 = vld [vmem:[#allocation2 + $0x10] sm:$0xff]
    %v1094 = vld [vmem:[#allocation2 + $0x18] sm:$0xff]
    %v1095 = vld [vmem:[#allocation2 + $0x20] sm:$0xff]
    %v1096 = vld [vmem:[#allocation2 + $0x28] sm:$0xff]
    %v1097 = vld [vmem:[#allocation2 + $0x30] sm:$0xff]
    %v1098 = vld [vmem:[#allocation2 + $0x38] sm:$0xff]
    %v1099 = vld [vmem:[#allocation2 + $0x40] sm:$0xff]
    %v1100 = vld [vmem:[#allocation2 + $0x48] sm:$0xff]
    %v1101 = vld [vmem:[#allocation2 + $0x50] sm:$0xff]
    %v1102 = vld [vmem:[#allocation2 + $0x58] sm:$0xff]
    %v1103 = vld [vmem:[#allocation2 + $0x60] sm:$0xff]
    %v1104 = vld [vmem:[#allocation2 + $0x68] sm:$0xff]
    %v1105 = vld [vmem:[#allocation2 + $0x70] sm:$0xff]
    %v1106 = vld [vmem:[#allocation2 + $0x78] sm:$0xff]
    %v1107 = vadd.f32 %v1091, %v1075
    %v1108 = vadd.f32 %v1092, %v1076
    %v1109 = vadd.f32 %v1093, %v1077
    %v1110 = vadd.f32 %v1094, %v1078
    %v1111 = vadd.f32 %v1095, %v1079
    %v1112 = vadd.f32 %v1096, %v1080
    %v1113 = vadd.f32 %v1097, %v1081
    %v1114 = vadd.f32 %v1098, %v1082
    %v1115 = vadd.f32 %v1099, %v1083
    %v1116 = vadd.f32 %v1100, %v1084
    %v1117 = vadd.f32 %v1101, %v1085
    %v1118 = vadd.f32 %v1102, %v1086
    %v1119 = vadd.f32 %v1103, %v1087
    %v1120 = vadd.f32 %v1104, %v1088
    %v1121 = vadd.f32 %v1105, %v1089
    %v1122 = vadd.f32 %v1106, %v1090
    %1123 = vst [vmem:[#allocation2] sm:$0xff] %v1107
    %1124 = vst [vmem:[#allocation2 + $0x8] sm:$0xff] %v1108
    %1125 = vst [vmem:[#allocation2 + $0x10] sm:$0xff] %v1109
    %1126 = vst [vmem:[#allocation2 + $0x18] sm:$0xff] %v1110
    %1127 = vst [vmem:[#allocation2 + $0x20] sm:$0xff] %v1111
    %1128 = vst [vmem:[#allocation2 + $0x28] sm:$0xff] %v1112
    %1129 = vst [vmem:[#allocation2 + $0x30] sm:$0xff] %v1113
    %1130 = vst [vmem:[#allocation2 + $0x38] sm:$0xff] %v1114
    %1131 = vst [vmem:[#allocation2 + $0x40] sm:$0xff] %v1115
    %1132 = vst [vmem:[#allocation2 + $0x48] sm:$0xff] %v1116
    %1133 = vst [vmem:[#allocation2 + $0x50] sm:$0xff] %v1117
    %1134 = vst [vmem:[#allocation2 + $0x58] sm:$0xff] %v1118
    %1135 = vst [vmem:[#allocation2 + $0x60] sm:$0xff] %v1119
    %1136 = vst [vmem:[#allocation2 + $0x68] sm:$0xff] %v1120
    %1137 = vst [vmem:[#allocation2 + $0x70] sm:$0xff] %v1121
    %1138 = vst [vmem:[#allocation2 + $0x78] sm:$0xff] %v1122
  $region21: #{tpu_custom_call.1} parent=0 // pred_fallthru
    _
  // Predicated region
  $region22: #{tpu_custom_call.1} parent=0 // pred_check
    %p1139 = pneg %p11
  $region23: #{tpu_custom_call.1} parent=0 // pred_check_branch
    %1141 = sbr.rel (%p1139) target = $region25
  $region24: #{tpu_custom_call.1} parent=0 // pred_region
    %v1142 = vld [vmem:[#allocation2] sm:$0xff]
    %v1143 = vld [vmem:[#allocation2 + $0x8] sm:$0xff]
    %v1144 = vld [vmem:[#allocation2 + $0x10] sm:$0xff]
    %v1145 = vld [vmem:[#allocation2 + $0x18] sm:$0xff]
    %v1146 = vld [vmem:[#allocation2 + $0x20] sm:$0xff]
    %v1147 = vld [vmem:[#allocation2 + $0x28] sm:$0xff]
    %v1148 = vld [vmem:[#allocation2 + $0x30] sm:$0xff]
    %v1149 = vld [vmem:[#allocation2 + $0x38] sm:$0xff]
    %v1150 = vld [vmem:[#allocation2 + $0x40] sm:$0xff]
    %v1151 = vld [vmem:[#allocation2 + $0x48] sm:$0xff]
    %v1152 = vld [vmem:[#allocation2 + $0x50] sm:$0xff]
    %v1153 = vld [vmem:[#allocation2 + $0x58] sm:$0xff]
    %v1154 = vld [vmem:[#allocation2 + $0x60] sm:$0xff]
    %v1155 = vld [vmem:[#allocation2 + $0x68] sm:$0xff]
    %v1156 = vld [vmem:[#allocation2 + $0x70] sm:$0xff]
    %v1157 = vld [vmem:[#allocation2 + $0x78] sm:$0xff]
    %v1158 = vadd.f32 %v1142, %v1143
    %1159 = vadd.xlane.f32.xlu0 %v1158
    %v1160 = vpop.xlane.xlu0 %1159
    %v1161 = vadd.f32 %v1144, %v1145
    %1162 = vadd.xlane.f32.xlu0 %v1161
    %v1163 = vpop.xlane.xlu0 %1162
    %v1164 = vadd.f32 %v1146, %v1147
    %1165 = vadd.xlane.f32.xlu0 %v1164
    %v1166 = vpop.xlane.xlu0 %1165
    %v1167 = vadd.f32 %v1148, %v1149
    %1168 = vadd.xlane.f32.xlu0 %v1167
    %v1169 = vpop.xlane.xlu0 %1168
    %v1170 = vadd.f32 %v1150, %v1151
    %1171 = vadd.xlane.f32.xlu0 %v1170
    %v1172 = vpop.xlane.xlu0 %1171
    %v1173 = vadd.f32 %v1152, %v1153
    %1174 = vadd.xlane.f32.xlu0 %v1173
    %v1175 = vpop.xlane.xlu0 %1174
    %v1176 = vadd.f32 %v1154, %v1155
    %1177 = vadd.xlane.f32.xlu0 %v1176
    %v1178 = vpop.xlane.xlu0 %1177
    %v1179 = vadd.f32 %v1156, %v1157
    %1180 = vadd.xlane.f32.xlu0 %v1179
    %v1181 = vpop.xlane.xlu0 %1180
    %v1182 = vmul.f32 %v1160, 0.3740084
    %v1183 = vmul.f32 %v1163, 0.3740084
    %v1184 = vmul.f32 %v1166, 0.3740084
    %v1185 = vmul.f32 %v1169, 0.3740084
    %v1186 = vmul.f32 %v1172, 0.3740084
    %v1187 = vmul.f32 %v1175, 0.3740084
    %v1188 = vmul.f32 %v1178, 0.3740084
    %v1189 = vmul.f32 %v1181, 0.3740084
    %vm1190 = vcmask 7168
    %1191 = vst.msk [vmem:[%s2] sm:$0xff] %vm1190, %v1182
    %1192 = vst.msk [vmem:[%s2 + $0x8] sm:$0xff] %vm1190, %v1183
    %1193 = vst.msk [vmem:[%s2 + $0x10] sm:$0xff] %vm1190, %v1184
    %1194 = vst.msk [vmem:[%s2 + $0x18] sm:$0xff] %vm1190, %v1185
    %1195 = vst.msk [vmem:[%s2 + $0x20] sm:$0xff] %vm1190, %v1186
    %1196 = vst.msk [vmem:[%s2 + $0x28] sm:$0xff] %vm1190, %v1187
    %1197 = vst.msk [vmem:[%s2 + $0x30] sm:$0xff] %vm1190, %v1188
    %1198 = vst.msk [vmem:[%s2 + $0x38] sm:$0xff] %vm1190, %v1189
  $region25: #{tpu_custom_call.1} parent=0 // pred_fallthru
    _
  // Predicated region
  $region26: #{tpu_custom_call.1} parent=0 // pred_check
    _
  $region27: #{tpu_custom_call.1} parent=0 // pred_check_branch
    %1200 = sbr.rel (0) target = $region29
  $region28: #{tpu_custom_call.1} parent=0 // pred_region
    _
  $region29: #{tpu_custom_call.1} parent=0 // pred_fallthru
    _
  // Predicated region
  $region30: #{tpu_custom_call.1} parent=0 // pred_check
    _
  $region31: #{tpu_custom_call.1} parent=0 // pred_check_branch
    %1202 = sbr.rel (0) target = $region33
  $region32: #{tpu_custom_call.1} parent=0 // pred_region
    _
  $region33: #{tpu_custom_call.1} parent=0 // pred_fallthru
    _

</llo_original>
